<compile_context>
chip_gen: v5e
topology: v5e:2x2
jax: 0.10.0
libtpu: 0.0.40
codegen_flags: <defaults>
</compile_context>

<pallas_src>
import functools
import math

import jax
import jax.numpy as jnp
from jax.experimental import pallas as pl
from jax.experimental.pallas import tpu as pltpu

_NEG_LARGE = -1e30   # finite "masked" value: avoids NaN on fully-masked rows


def _attention_kernel(s_ref, wq_ref, bq_ref, wk_ref, bk_ref, enc_ref, mask_ref,
                      out_ref, q_sc, m_sc, l_sc, acc_sc, *, scale):
    li = pl.program_id(1)

    # ---- per-batch-block init (first L tile): q projection + accumulators ----
    @pl.when(li == 0)
    def _init():
        q = jnp.dot(s_ref[...], wq_ref[...],
                    preferred_element_type=jnp.float32) + bq_ref[...]
        q_sc[...] = (q * scale)[:, None, :]          # fold 1/sqrt(H) in once
        m_sc[...] = jnp.full_like(m_sc, -jnp.inf)
        l_sc[...] = jnp.zeros_like(l_sc)
        acc_sc[...] = jnp.zeros_like(acc_sc)

    enc = enc_ref[...]                               # [tB, tL, E]
    tb, tl, e = enc.shape
    h = wk_ref.shape[1]

    # k = Linear(enc): single MXU matmul over the flattened tile
    k = jnp.dot(enc.reshape(tb * tl, e), wk_ref[...],
                preferred_element_type=jnp.float32) + bk_ref[...]
    k = k.reshape(tb, tl, h)

    # scores = (q / sqrt(H)) . k^T + additive mask       [tB, 1, tL]
    scores = jnp.einsum("bqh,blh->bql", q_sc[...], k,
                        preferred_element_type=jnp.float32) + mask_ref[...]

    # ---- online softmax update over L tiles ----
    m_prev = m_sc[...]
    m_new = jnp.maximum(m_prev, jnp.max(scores, axis=-1, keepdims=True))
    alpha = jnp.exp(m_prev - m_new)
    p = jnp.exp(scores - m_new)

    l_sc[...] = alpha * l_sc[...] + jnp.sum(p, axis=-1, keepdims=True)
    acc_sc[...] = alpha * acc_sc[...] + jnp.einsum(
        "bql,ble->bqe", p.astype(enc.dtype), enc,
        preferred_element_type=jnp.float32)
    m_sc[...] = m_new

    # ---- finalize on last L tile ----
    @pl.when(li == pl.num_programs(1) - 1)
    def _finalize():
        inv = pl.reciprocal(l_sc[...], approx=True)          # EUP, frees VALU
        out_ref[...] = (acc_sc[...] * inv).astype(out_ref.dtype)


def _pad_axis(x, axis, mult, value=0.0):
    pad = (-x.shape[axis]) % mult
    if pad == 0:
        return x
    widths = [(0, 0)] * x.ndim
    widths[axis] = (0, pad)
    return jnp.pad(x, widths, constant_values=value)


def _compiler_params(vmem_limit_bytes):
    cp_cls = getattr(pltpu, "CompilerParams", None) or getattr(pltpu, "TPUCompilerParams")
    return cp_cls(dimension_semantics=("parallel", "arbitrary"),
                  vmem_limit_bytes=int(vmem_limit_bytes))


def attention_forward(s, enc_output, mask_bool, params, *,
                      compute_dtype=jnp.float32, block_b=8, block_l=128):
    """s:[T,B,Dd], enc_output:[L,B,E] (torch layout), mask_bool:[B,Lm] bool.

    params = (Wq^T [Dd,H], bq [1,H], Wk^T [E,H], bk [1,H]).
    Returns [1, B, E] float32 (== torch result.transpose(0, 1)).
    """
    wq, bq, wk, bk = params
    T, B, Dd = s.shape
    L, _, E = enc_output.shape
    H = wq.shape[1]
    assert L % mask_bool.shape[1] == 0, "src_len must be a multiple of mask length"

    # ---- glue hoisted out of the kernel ------------------------------------
    s_mean = jnp.mean(s, axis=0)                                   # [B, Dd]
    enc_bt = jnp.transpose(enc_output, (1, 0, 2))                  # [B, L, E]
    num_attr = L // mask_bool.shape[1]
    mask_add = jnp.where(jnp.tile(mask_bool, (1, num_attr)),
                         0.0, _NEG_LARGE).astype(jnp.float32)      # [B, L]

    # ---- pad to lane-dense TPU tile shapes ---------------------------------
    Bp = B + (-B) % block_b
    Lp = L + (-L) % block_l
    Hp = H + (-H) % 128
    Ep = E + (-E) % 128
    Ddp = Dd + (-Dd) % 128

    s_mean = _pad_axis(_pad_axis(s_mean, 0, block_b), 1, 128).astype(compute_dtype)
    enc_bt = _pad_axis(_pad_axis(_pad_axis(enc_bt, 0, block_b), 1, block_l), 2, 128)
    enc_bt = enc_bt.astype(compute_dtype)
    # padded source positions / padded batch rows stay masked out
    mask_add = _pad_axis(_pad_axis(mask_add, 1, block_l, value=_NEG_LARGE),
                         0, block_b, value=_NEG_LARGE)[:, None, :]  # [Bp, 1, Lp]

    wq_p = _pad_axis(_pad_axis(wq, 0, 128), 1, 128).astype(compute_dtype)   # [Ddp, Hp]
    wk_p = _pad_axis(_pad_axis(wk, 0, 128), 1, 128).astype(compute_dtype)   # [Ep, Hp]
    bq_p = _pad_axis(bq, 1, 128).astype(jnp.float32)                        # [1, Hp]
    bk_p = _pad_axis(bk, 1, 128).astype(jnp.float32)                        # [1, Hp]

    grid = (Bp // block_b, Lp // block_l)
    isz = jnp.dtype(compute_dtype).itemsize

    # scoped-VMEM budget: double-buffered input tiles + output + scratch/temps
    blk_in = (block_b * Ddp * isz                       # s_mean tile
              + block_b * block_l * Ep * isz            # enc tile
              + block_b * block_l * 4                   # mask tile
              + (Ddp * Hp + Ep * Hp) * isz + 2 * Hp * 4)  # weights + biases
    scratch = 4 * block_b * (Hp + Ep + 2)                       # accumulators
    temps = 4 * block_b * block_l * (Hp + 4)                    # k + scores/p
    need = 2 * blk_in + 2 * block_b * Ep * 4 + scratch + temps
    vmem_limit = min(48 * 2 ** 20, max(16 * 2 ** 20, 2 * need))

    kernel = functools.partial(_attention_kernel, scale=1.0 / math.sqrt(H))

    out_p = pl.pallas_call(
        kernel,
        out_shape=jax.ShapeDtypeStruct((Bp, 1, Ep), jnp.float32),
        grid=grid,
        in_specs=[
            pl.BlockSpec((block_b, Ddp), lambda b, l: (b, 0)),              # s_mean
            pl.BlockSpec((Ddp, Hp), lambda b, l: (0, 0)),                   # Wq^T
            pl.BlockSpec((1, Hp), lambda b, l: (0, 0)),                     # bq
            pl.BlockSpec((Ep, Hp), lambda b, l: (0, 0)),                    # Wk^T
            pl.BlockSpec((1, Hp), lambda b, l: (0, 0)),                     # bk
            pl.BlockSpec((block_b, block_l, Ep), lambda b, l: (b, l, 0)),   # enc
            pl.BlockSpec((block_b, 1, block_l), lambda b, l: (b, 0, l)),    # mask
        ],
        out_specs=pl.BlockSpec((block_b, 1, Ep), lambda b, l: (b, 0, 0)),
        scratch_shapes=[
            pltpu.VMEM((block_b, 1, Hp), jnp.float32),   # q / sqrt(H)
            pltpu.VMEM((block_b, 1, 1), jnp.float32),    # running max
            pltpu.VMEM((block_b, 1, 1), jnp.float32),    # running denominator
            pltpu.VMEM((block_b, 1, Ep), jnp.float32),   # running numerator
        ],
        compiler_params=_compiler_params(vmem_limit),
    )(s_mean, wq_p, bq_p, wk_p, bk_p, enc_bt, mask_add)

    return out_p[:B, 0, :E][None, :, :]                 # [1, B, E]


# ------------------------------ test harness --------------------------------
def _ref_forward(s, enc_output, mask_bool, Wq, bq, Wk, bk, hidden):
    sm = s.mean(0)                                      # [B, Dd]
    q = sm @ Wq.T + bq                                  # [B, H]
    enc_bt = jnp.transpose(enc_output, (1, 0, 2))       # [B, L, E]
    k = enc_bt @ Wk.T + bk                              # [B, L, H]
    scores = jnp.einsum("bh,blh->bl", q, k) / math.sqrt(hidden)
    L = enc_output.shape[0]
    mfull = jnp.tile(mask_bool, (1, L // mask_bool.shape[1]))
    scores = jnp.where(mfull, scores, -jnp.inf)
    probs = jax.nn.softmax(scores, axis=-1)
    return jnp.einsum("bl,ble->be", probs, enc_bt)[None, :, :]   # [1, B, E]


def _run_case(key, *, T, B, Dd, E, L, Lm, compute_dtype, atol, rtol):
    H = E                                               # self.hidden = enc_hid_dim
    ks = jax.random.split(key, 7)
    s = jax.random.normal(ks[0], (T, B, Dd), jnp.float32)
    enc_output = jax.random.normal(ks[1], (L, B, E), jnp.float32)
    mask_bool = jax.random.bernoulli(ks[2], 0.7, (B, Lm))
    mask_bool = mask_bool.at[:, 0].set(True)            # >= 1 kept slot per row

    # nn.Linear params (torch: W[out,in], b[out]); kernel consumes W^T, b[None]
    Wq = jax.random.normal(ks[3], (H, Dd), jnp.float32) * 0.1
    bq = jax.random.normal(ks[4], (H,), jnp.float32) * 0.1
    Wk = jax.random.normal(ks[5], (H, E), jnp.float32) * 0.1
    bk = jax.random.normal(ks[6], (H,), jnp.float32) * 0.1
    params = (Wq.T, bq[None, :], Wk.T, bk[None, :])

    out = attention_forward(s, enc_output, mask_bool, params,
                            compute_dtype=compute_dtype)
    out = jax.block_until_ready(out)

    ref = _ref_forward(s, enc_output, mask_bool, Wq, bq, Wk, bk, H)
    assert out.shape == (1, B, E), out.shape
    err = float(jnp.max(jnp.abs(out - ref)))
    assert jnp.allclose(out, ref, atol=atol, rtol=rtol), f"max abs err {err}"


if __name__ == "__main__":
    k1, k2, k3 = jax.random.split(jax.random.PRNGKey(0), 3)

    # small shapes implied by the module (f32 path)
    _run_case(k1, T=3, B=2, Dd=32, E=32, L=8, Lm=4,
              compute_dtype=jnp.float32, atol=2e-3, rtol=2e-3)
    # multiple batch blocks + multiple L tiles (exercises online softmax & parallel B axis)
    _run_case(k2, T=3, B=12, Dd=32, E=32, L=256, Lm=64,
              compute_dtype=jnp.float32, atol=2e-3, rtol=2e-3)
    # bf16 matmul operands (softmax / accumulators stay f32)
    _run_case(k3, T=3, B=2, Dd=32, E=32, L=8, Lm=4,
              compute_dtype=jnp.bfloat16, atol=5e-2, rtol=5e-2)

    print("KERNEL_OK")
</pallas_src>

<mosaic_0001>
module attributes {stable_mosaic.version = 11 : i64} {
  func.func @_attention_kernel(%arg0: i32, %arg1: i32, %arg2: memref<8x128xf32, #tpu.memory_space<vmem>>, %arg3: memref<128x128xf32, #tpu.memory_space<vmem>>, %arg4: memref<1x128xf32, #tpu.memory_space<vmem>>, %arg5: memref<128x128xf32, #tpu.memory_space<vmem>>, %arg6: memref<1x128xf32, #tpu.memory_space<vmem>>, %arg7: memref<8x128x128xf32, #tpu.memory_space<vmem>>, %arg8: memref<8x1x128xf32, #tpu.memory_space<vmem>>, %arg9: memref<8x1x128xf32, #tpu.memory_space<vmem>>, %arg10: memref<8x1x128xf32, #tpu.memory_space<vmem>>, %arg11: memref<8x1x1xf32, #tpu.memory_space<vmem>>, %arg12: memref<8x1x1xf32, #tpu.memory_space<vmem>>, %arg13: memref<8x1x128xf32, #tpu.memory_space<vmem>>) attributes {dimension_semantics = [#tpu.dimension_semantics<parallel>, #tpu.dimension_semantics<arbitrary>], iteration_bounds = array<i64: 1, 1>, scalar_prefetch = 0 : i64, scratch_operands = 4 : i64, tpu.core_type = #tpu.core_type<tc>, window_params = [{transform_indices = @transform_0, window_bounds = array<i64: 8, 128>}, {pipeline_mode = #tpu.pipeline_mode<synchronous>, transform_indices = @transform_1, window_bounds = array<i64: 128, 128>}, {pipeline_mode = #tpu.pipeline_mode<synchronous>, transform_indices = @transform_2, window_bounds = array<i64: 1, 128>}, {pipeline_mode = #tpu.pipeline_mode<synchronous>, transform_indices = @transform_3, window_bounds = array<i64: 128, 128>}, {pipeline_mode = #tpu.pipeline_mode<synchronous>, transform_indices = @transform_4, window_bounds = array<i64: 1, 128>}, {transform_indices = @transform_5, window_bounds = array<i64: 8, 128, 128>}, {transform_indices = @transform_6, window_bounds = array<i64: 8, 1, 128>}, {transform_indices = @transform_7, window_bounds = array<i64: 8, 1, 128>}]} {
    %c0_i32 = arith.constant 0 : i32
    %0 = arith.cmpi eq, %arg1, %c0_i32 : i32
    %1 = arith.extui %0 : i1 to i32
    %c0_i32_0 = arith.constant 0 : i32
    %2 = arith.cmpi ne, %1, %c0_i32_0 : i32
    scf.if %2 {
      %c0_37 = arith.constant 0 : index
      %c0_38 = arith.constant 0 : index
      %40 = vector.load %arg2[%c0_37, %c0_38] : memref<8x128xf32, #tpu.memory_space<vmem>>, vector<8x128xf32>
      %c0_39 = arith.constant 0 : index
      %c0_40 = arith.constant 0 : index
      %41 = vector.load %arg3[%c0_39, %c0_40] : memref<128x128xf32, #tpu.memory_space<vmem>>, vector<128x128xf32>
      %cst_41 = arith.constant dense<0.000000e+00> : vector<8x128xf32>
      %42 = tpu.matmul %40, %41, %cst_41 {dimension_numbers = #tpu.dot_dimension_numbers<[1], [0], [0], [1], [0, 0, 1, 1], [], []>} : vector<8x128xf32>, vector<128x128xf32>, vector<8x128xf32> -> vector<8x128xf32>
      %c0_42 = arith.constant 0 : index
      %c0_43 = arith.constant 0 : index
      %43 = vector.load %arg4[%c0_42, %c0_43] : memref<1x128xf32, #tpu.memory_space<vmem>>, vector<1x128xf32>
      %44 = vector.broadcast %43 : vector<1x128xf32> to vector<8x128xf32>
      %45 = arith.addf %42, %44 : vector<8x128xf32>
      %cst_44 = arith.constant 0.176776692 : f32
      %46 = vector.broadcast %cst_44 : f32 to vector<8x128xf32>
      %47 = arith.mulf %45, %46 : vector<8x128xf32>
      %48 = vector.shape_cast %47 : vector<8x128xf32> to vector<8x1x128xf32>
      %c0_45 = arith.constant 0 : index
      %c0_46 = arith.constant 0 : index
      %c0_47 = arith.constant 0 : index
      %49 = vector.load %arg10[%c0_45, %c0_46, %c0_47] : memref<8x1x128xf32, #tpu.memory_space<vmem>>, vector<8x1x128xf32>
      tpu.vector_store %arg10[%c0_45, %c0_46, %c0_47], %48 {strides = array<i32>} : memref<8x1x128xf32, #tpu.memory_space<vmem>>, vector<8x1x128xf32>,
      %cst_48 = arith.constant 0xFF800000 : f32
      %50 = vector.broadcast %cst_48 : f32 to vector<8x1x1xf32>
      %c0_49 = arith.constant 0 : index
      %c0_50 = arith.constant 0 : index
      %c0_51 = arith.constant 0 : index
      %51 = vector.load %arg11[%c0_49, %c0_50, %c0_51] : memref<8x1x1xf32, #tpu.memory_space<vmem>>, vector<8x1x1xf32>
      tpu.vector_store %arg11[%c0_49, %c0_50, %c0_51], %50 {strides = array<i32>} : memref<8x1x1xf32, #tpu.memory_space<vmem>>, vector<8x1x1xf32>,
      %cst_52 = arith.constant 0.000000e+00 : f32
      %52 = vector.broadcast %cst_52 : f32 to vector<8x1x1xf32>
      %c0_53 = arith.constant 0 : index
      %c0_54 = arith.constant 0 : index
      %c0_55 = arith.constant 0 : index
      %53 = vector.load %arg12[%c0_53, %c0_54, %c0_55] : memref<8x1x1xf32, #tpu.memory_space<vmem>>, vector<8x1x1xf32>
      tpu.vector_store %arg12[%c0_53, %c0_54, %c0_55], %52 {strides = array<i32>} : memref<8x1x1xf32, #tpu.memory_space<vmem>>, vector<8x1x1xf32>,
      %cst_56 = arith.constant 0.000000e+00 : f32
      %54 = vector.broadcast %cst_56 : f32 to vector<8x1x128xf32>
      %c0_57 = arith.constant 0 : index
      %c0_58 = arith.constant 0 : index
      %c0_59 = arith.constant 0 : index
      %55 = vector.load %arg13[%c0_57, %c0_58, %c0_59] : memref<8x1x128xf32, #tpu.memory_space<vmem>>, vector<8x1x128xf32>
      tpu.vector_store %arg13[%c0_57, %c0_58, %c0_59], %54 {strides = array<i32>} : memref<8x1x128xf32, #tpu.memory_space<vmem>>, vector<8x1x128xf32>,
    } else {
    }
    %c0 = arith.constant 0 : index
    %c0_1 = arith.constant 0 : index
    %c0_2 = arith.constant 0 : index
    %3 = vector.load %arg7[%c0, %c0_1, %c0_2] : memref<8x128x128xf32, #tpu.memory_space<vmem>>, vector<8x128x128xf32>
    %4 = vector.shape_cast %3 : vector<8x128x128xf32> to vector<1024x128xf32>
    %c0_3 = arith.constant 0 : index
    %c0_4 = arith.constant 0 : index
    %5 = vector.load %arg5[%c0_3, %c0_4] : memref<128x128xf32, #tpu.memory_space<vmem>>, vector<128x128xf32>
    %cst = arith.constant dense<0.000000e+00> : vector<1024x128xf32>
    %6 = tpu.matmul %4, %5, %cst {dimension_numbers = #tpu.dot_dimension_numbers<[1], [0], [0], [1], [0, 0, 1, 1], [], []>} : vector<1024x128xf32>, vector<128x128xf32>, vector<1024x128xf32> -> vector<1024x128xf32>
    %c0_5 = arith.constant 0 : index
    %c0_6 = arith.constant 0 : index
    %7 = vector.load %arg6[%c0_5, %c0_6] : memref<1x128xf32, #tpu.memory_space<vmem>>, vector<1x128xf32>
    %8 = vector.broadcast %7 : vector<1x128xf32> to vector<1024x128xf32>
    %9 = arith.addf %6, %8 : vector<1024x128xf32>
    %10 = vector.shape_cast %9 : vector<1024x128xf32> to vector<8x128x128xf32>
    %c0_7 = arith.constant 0 : index
    %c0_8 = arith.constant 0 : index
    %c0_9 = arith.constant 0 : index
    %11 = vector.load %arg10[%c0_7, %c0_8, %c0_9] : memref<8x1x128xf32, #tpu.memory_space<vmem>>, vector<8x1x128xf32>
    "tpu.trace_start"() <{level = 10 : i32, message = "bqh,blh->bql"}> : () -> ()
    %cst_10 = arith.constant dense<0.000000e+00> : vector<8x1x128xf32>
    %12 = tpu.matmul %11, %10, %cst_10 {dimension_numbers = #tpu.dot_dimension_numbers<[2], [2], [1], [1], [0, 0, 0, 1, 1, 1], [0], [0]>} : vector<8x1x128xf32>, vector<8x128x128xf32>, vector<8x1x128xf32> -> vector<8x1x128xf32>
    "tpu.trace_stop"() : () -> ()
    %c0_11 = arith.constant 0 : index
    %c0_12 = arith.constant 0 : index
    %c0_13 = arith.constant 0 : index
    %13 = vector.load %arg8[%c0_11, %c0_12, %c0_13] : memref<8x1x128xf32, #tpu.memory_space<vmem>>, vector<8x1x128xf32>
    %14 = arith.addf %12, %13 : vector<8x1x128xf32>
    %c0_14 = arith.constant 0 : index
    %c0_15 = arith.constant 0 : index
    %c0_16 = arith.constant 0 : index
    %15 = vector.load %arg11[%c0_14, %c0_15, %c0_16] : memref<8x1x1xf32, #tpu.memory_space<vmem>>, vector<8x1x1xf32>
    %cst_17 = arith.constant dense<0xFF800000> : vector<8x1xf32>
    %16 = vector.multi_reduction <maximumf>, %14, %cst_17 [2] : vector<8x1x128xf32> to vector<8x1xf32>
    %17 = vector.shape_cast %16 : vector<8x1xf32> to vector<8x1x1xf32>
    %18 = arith.maximumf %15, %17 : vector<8x1x1xf32>
    %19 = arith.subf %15, %18 : vector<8x1x1xf32>
    %20 = math.exp %19 : vector<8x1x1xf32>
    %21 = vector.broadcast %18 : vector<8x1x1xf32> to vector<8x1x128xf32>
    %22 = arith.subf %14, %21 : vector<8x1x128xf32>
    %23 = math.exp %22 : vector<8x1x128xf32>
    %c0_18 = arith.constant 0 : index
    %c0_19 = arith.constant 0 : index
    %c0_20 = arith.constant 0 : index
    %24 = vector.load %arg12[%c0_18, %c0_19, %c0_20] : memref<8x1x1xf32, #tpu.memory_space<vmem>>, vector<8x1x1xf32>
    %25 = arith.mulf %20, %24 : vector<8x1x1xf32>
    %cst_21 = arith.constant dense<0.000000e+00> : vector<8x1xf32>
    %26 = vector.multi_reduction <add>, %23, %cst_21 [2] : vector<8x1x128xf32> to vector<8x1xf32>
    %27 = vector.shape_cast %26 : vector<8x1xf32> to vector<8x1x1xf32>
    %28 = arith.addf %25, %27 : vector<8x1x1xf32>
    %c0_22 = arith.constant 0 : index
    %c0_23 = arith.constant 0 : index
    %c0_24 = arith.constant 0 : index
    %29 = vector.load %arg12[%c0_22, %c0_23, %c0_24] : memref<8x1x1xf32, #tpu.memory_space<vmem>>, vector<8x1x1xf32>
    tpu.vector_store %arg12[%c0_22, %c0_23, %c0_24], %28 {strides = array<i32>} : memref<8x1x1xf32, #tpu.memory_space<vmem>>, vector<8x1x1xf32>,
    %c0_25 = arith.constant 0 : index
    %c0_26 = arith.constant 0 : index
    %c0_27 = arith.constant 0 : index
    %30 = vector.load %arg13[%c0_25, %c0_26, %c0_27] : memref<8x1x128xf32, #tpu.memory_space<vmem>>, vector<8x1x128xf32>
    %31 = vector.broadcast %20 : vector<8x1x1xf32> to vector<8x1x128xf32>
    %32 = arith.mulf %31, %30 : vector<8x1x128xf32>
    "tpu.trace_start"() <{level = 10 : i32, message = "bql,ble->bqe"}> : () -> ()
    %cst_28 = arith.constant dense<0.000000e+00> : vector<8x1x128xf32>
    %33 = tpu.matmul %23, %3, %cst_28 {dimension_numbers = #tpu.dot_dimension_numbers<[2], [1], [1], [2], [0, 0, 0, 1, 1, 2], [0], [0]>} : vector<8x1x128xf32>, vector<8x128x128xf32>, vector<8x1x128xf32> -> vector<8x1x128xf32>
    "tpu.trace_stop"() : () -> ()
    %34 = arith.addf %32, %33 : vector<8x1x128xf32>
    %c0_29 = arith.constant 0 : index
    %c0_30 = arith.constant 0 : index
    %c0_31 = arith.constant 0 : index
    %35 = vector.load %arg13[%c0_29, %c0_30, %c0_31] : memref<8x1x128xf32, #tpu.memory_space<vmem>>, vector<8x1x128xf32>
    tpu.vector_store %arg13[%c0_29, %c0_30, %c0_31], %34 {strides = array<i32>} : memref<8x1x128xf32, #tpu.memory_space<vmem>>, vector<8x1x128xf32>,
    %c0_32 = arith.constant 0 : index
    %c0_33 = arith.constant 0 : index
    %c0_34 = arith.constant 0 : index
    %36 = vector.load %arg11[%c0_32, %c0_33, %c0_34] : memref<8x1x1xf32, #tpu.memory_space<vmem>>, vector<8x1x1xf32>
    tpu.vector_store %arg11[%c0_32, %c0_33, %c0_34], %18 {strides = array<i32>} : memref<8x1x1xf32, #tpu.memory_space<vmem>>, vector<8x1x1xf32>,
    %c0_i32_35 = arith.constant 0 : i32
    %37 = arith.cmpi eq, %arg1, %c0_i32_35 : i32
    %38 = arith.extui %37 : i1 to i32
    %c0_i32_36 = arith.constant 0 : i32
    %39 = arith.cmpi ne, %38, %c0_i32_36 : i32
    scf.if %39 {
      %c0_37 = arith.constant 0 : index
      %c0_38 = arith.constant 0 : index
      %c0_39 = arith.constant 0 : index
      %40 = vector.load %arg12[%c0_37, %c0_38, %c0_39] : memref<8x1x1xf32, #tpu.memory_space<vmem>>, vector<8x1x1xf32>
      %41 = tpu.reciprocal %40 {approx = true} : vector<8x1x1xf32> -> vector<8x1x1xf32>
      %c0_40 = arith.constant 0 : index
      %c0_41 = arith.constant 0 : index
      %c0_42 = arith.constant 0 : index
      %42 = vector.load %arg13[%c0_40, %c0_41, %c0_42] : memref<8x1x128xf32, #tpu.memory_space<vmem>>, vector<8x1x128xf32>
      %43 = vector.broadcast %41 : vector<8x1x1xf32> to vector<8x1x128xf32>
      %44 = arith.mulf %42, %43 : vector<8x1x128xf32>
      %c0_43 = arith.constant 0 : index
      %c0_44 = arith.constant 0 : index
      %c0_45 = arith.constant 0 : index
      %45 = vector.load %arg9[%c0_43, %c0_44, %c0_45] : memref<8x1x128xf32, #tpu.memory_space<vmem>>, vector<8x1x128xf32>
      tpu.vector_store %arg9[%c0_43, %c0_44, %c0_45], %44 {strides = array<i32>} : memref<8x1x128xf32, #tpu.memory_space<vmem>>, vector<8x1x128xf32>,
    } else {
    }
    return
  }
  func.func @transform_0(%arg0: i32, %arg1: i32) -> (i32, i32) {
    %c0_i32 = arith.constant 0 : i32
    %c0_i32_0 = arith.constant 0 : i32
    return %arg0, %c0_i32 : i32, i32
  }
  func.func @transform_1(%arg0: i32, %arg1: i32) -> (i32, i32) {
    %c0_i32 = arith.constant 0 : i32
    %c0_i32_0 = arith.constant 0 : i32
    %c0_i32_1 = arith.constant 0 : i32
    return %c0_i32, %c0_i32_0 : i32, i32
  }
  func.func @transform_2(%arg0: i32, %arg1: i32) -> (i32, i32) {
    %c0_i32 = arith.constant 0 : i32
    %c0_i32_0 = arith.constant 0 : i32
    %c0_i32_1 = arith.constant 0 : i32
    return %c0_i32, %c0_i32_0 : i32, i32
  }
  func.func @transform_3(%arg0: i32, %arg1: i32) -> (i32, i32) {
    %c0_i32 = arith.constant 0 : i32
    %c0_i32_0 = arith.constant 0 : i32
    %c0_i32_1 = arith.constant 0 : i32
    return %c0_i32, %c0_i32_0 : i32, i32
  }
  func.func @transform_4(%arg0: i32, %arg1: i32) -> (i32, i32) {
    %c0_i32 = arith.constant 0 : i32
    %c0_i32_0 = arith.constant 0 : i32
    %c0_i32_1 = arith.constant 0 : i32
    return %c0_i32, %c0_i32_0 : i32, i32
  }
  func.func @transform_5(%arg0: i32, %arg1: i32) -> (i32, i32, i32) {
    %c0_i32 = arith.constant 0 : i32
    %c0_i32_0 = arith.constant 0 : i32
    return %arg0, %arg1, %c0_i32 : i32, i32, i32
  }
  func.func @transform_6(%arg0: i32, %arg1: i32) -> (i32, i32, i32) {
    %c0_i32 = arith.constant 0 : i32
    %c0_i32_0 = arith.constant 0 : i32
    return %arg0, %c0_i32, %arg1 : i32, i32, i32
  }
  func.func @transform_7(%arg0: i32, %arg1: i32) -> (i32, i32, i32) {
    %c0_i32 = arith.constant 0 : i32
    %c0_i32_0 = arith.constant 0 : i32
    %c0_i32_1 = arith.constant 0 : i32
    return %arg0, %c0_i32, %c0_i32_0 : i32, i32, i32
  }
}

</mosaic_0001>

<llo_original>
// kernel: tpu_custom_call.1
$region0: #{tpu_custom_call.1}
  #allocation0 [shape = 'u32[]', space=smem, size = 0x4, offset = 0x4, fixed_abs, tag = 'smem constant byte address 0x4 - core index']
  #allocation1 [shape = 'u32[72,128]{1,0:T(1,128)}', space=vmem, size = 0x9000, scoped, tag = 'internal scratch']
  #allocation2 [shape = 'f32[8,1,128]{2,1,0:T(1,128)}', space=vmem, size = 0x1000, scoped, tag = 'scratch operand']
  #allocation3 [shape = 'f32[8,1,1]{2,1,0:T(1,128)}', space=vmem, size = 0x1000, scoped, tag = 'scratch operand']
  #allocation4 [shape = 'f32[8,1,1]{2,1,0:T(1,128)}', space=vmem, size = 0x1000, scoped, tag = 'scratch operand']
  #allocation5 [shape = 'f32[8,1,128]{2,1,0:T(1,128)}', space=vmem, size = 0x1000, scoped, tag = 'scratch operand']
  %s0 = inlined_call_operand.hbm [shape: f32[8,128], index: 0, kind: input, shape index: {}]
  %s1 = inlined_call_operand.hbm [shape: f32[128,128], index: 1, kind: input, shape index: {}]
  %s2 = inlined_call_operand.vmem [shape: f32[1,128], index: 2, kind: input, shape index: {}]
  %s3 = inlined_call_operand.hbm [shape: f32[128,128], index: 3, kind: input, shape index: {}]
  %s4 = inlined_call_operand.vmem [shape: f32[1,128], index: 4, kind: input, shape index: {}]
  %s5 = inlined_call_operand.hbm [shape: f32[8,128,128], index: 5, kind: input, shape index: {}]
  %s6 = inlined_call_operand.hbm [shape: f32[8,1,128], index: 6, kind: input, shape index: {}]
  %s7 = inlined_call_operand.hbm [shape: f32[8,1,128], index: 7, kind: output, shape index: {}]
  %s8 = sld [smem:[#allocation0]]
  $region66: #{tpu_custom_call.1} parent=0
    _
  %s10 = ssub.s32 1, %s8
  %s11 = scalar_select 0, %s10, %s8
  $region1: #{tpu_custom_call.1} parent=0
    #allocation6 [shape = 'u8[4096]{0}', space=vmem, size = 0x1000, scoped, tag = 'input window, operand 0, single buffered']
    #allocation7 [shape = 's32[1]{0}', space=sflag, size = 0x4, scoped, tag = 'scoped memory for tpu_custom_call.1']
    #allocation8 [shape = 's32[1]{0}', space=sflag, size = 0x4, scoped, tag = 'scoped memory for tpu_custom_call.1']
    #allocation9 [shape = 'u8[65536]{0}', space=vmem, size = 0x10000, scoped, tag = 'input window, operand 1, single buffered']
    #allocation10 [shape = 's32[1]{0}', space=sflag, size = 0x4, scoped, tag = 'scoped memory for tpu_custom_call.1']
    #allocation11 [shape = 'u8[65536]{0}', space=vmem, size = 0x10000, scoped, tag = 'input window, operand 3, single buffered']
    #allocation12 [shape = 'u8[524288]{0}', space=vmem, size = 0x80000, scoped, tag = 'input window, operand 5, single buffered']
    #allocation13 [shape = 's32[1]{0}', space=sflag, size = 0x4, scoped, tag = 'scoped memory for tpu_custom_call.1']
    #allocation14 [shape = 'u8[4096]{0}', space=vmem, size = 0x1000, scoped, tag = 'input window, operand 6, single buffered']
    #allocation15 [shape = 'u8[4096]{0}', space=vmem, size = 0x1000, scoped, tag = 'output window, operand 0, single buffered']
    %12 = vsyncpa [#allocation7], 0
    %13 = vsyncpa [#allocation10], 0
    %14 = vsyncpa [#allocation13], 0
    %15 = vsyncpa [#allocation8], 0
    // Predicated region
    $region2: #{tpu_custom_call.1} parent=1 // pred_check
      _
    $region3: #{tpu_custom_call.1} parent=1 // pred_check_branch
      %17 = sbr.rel (0) target = $region5
    $region4: #{tpu_custom_call.1} parent=1 // pred_region
      %19 = vsyncadd [#allocation7], 0
      %s21 = sshll.u32 %s0, 4
      %s22 = int_to_ptr.hbm [resolvable:$true] %s21
      %s23 = sshll.u32 [#allocation6], 4
      %s24 = int_to_ptr.vmem [resolvable:$true] %s23
      %26 = dma.hbm_to_vmem [thread:$0]  %s22, 128, %s24, [#allocation7]
    $region5: #{tpu_custom_call.1} parent=1 // pred_fallthru
      _
    // Predicated region
    $region6: #{tpu_custom_call.1} parent=1 // pred_check
      _
    $region7: #{tpu_custom_call.1} parent=1 // pred_check_branch
      %28 = sbr.rel (0) target = $region9
    $region8: #{tpu_custom_call.1} parent=1 // pred_region
      %30 = vsyncadd [#allocation10], 0
      %s31 = sshll.u32 %s1, 4
      %s32 = int_to_ptr.hbm [resolvable:$true] %s31
      %s33 = sshll.u32 [#allocation9], 4
      %s34 = int_to_ptr.vmem [resolvable:$true] %s33
      %39 = dma.hbm_to_vmem [thread:$0]  %s32, 2048, %s34, [#allocation10], 128, 128, 8
    $region9: #{tpu_custom_call.1} parent=1 // pred_fallthru
      _
    // Predicated region
    $region10: #{tpu_custom_call.1} parent=1 // pred_check
      _
    $region11: #{tpu_custom_call.1} parent=1 // pred_check_branch
      %41 = sbr.rel (0) target = $region13
    $region12: #{tpu_custom_call.1} parent=1 // pred_region
      _
    $region13: #{tpu_custom_call.1} parent=1 // pred_fallthru
      _
    // Predicated region
    $region14: #{tpu_custom_call.1} parent=1 // pred_check
      _
    $region15: #{tpu_custom_call.1} parent=1 // pred_check_branch
      %43 = sbr.rel (0) target = $region17
    $region16: #{tpu_custom_call.1} parent=1 // pred_region
      %45 = vsyncadd [#allocation10], 0
      %s46 = sshll.u32 %s3, 4
      %s47 = int_to_ptr.hbm [resolvable:$true] %s46
      %s48 = sshll.u32 [#allocation11], 4
      %s49 = int_to_ptr.vmem [resolvable:$true] %s48
      %54 = dma.hbm_to_vmem [thread:$0]  %s47, 2048, %s49, [#allocation10], 128, 128, 8
    $region17: #{tpu_custom_call.1} parent=1 // pred_fallthru
      _
    // Predicated region
    $region18: #{tpu_custom_call.1} parent=1 // pred_check
      _
    $region19: #{tpu_custom_call.1} parent=1 // pred_check_branch
      %56 = sbr.rel (0) target = $region21
    $region20: #{tpu_custom_call.1} parent=1 // pred_region
      _
    $region21: #{tpu_custom_call.1} parent=1 // pred_fallthru
      _
    // Predicated region
    $region22: #{tpu_custom_call.1} parent=1 // pred_check
      _
    $region23: #{tpu_custom_call.1} parent=1 // pred_check_branch
      %58 = sbr.rel (0) target = $region25
    $region24: #{tpu_custom_call.1} parent=1 // pred_region
      %60 = vsyncadd [#allocation13], 0
      %s61 = sshll.u32 %s5, 4
      %s62 = int_to_ptr.hbm [resolvable:$true] %s61
      %s63 = sshll.u32 [#allocation12], 4
      %s64 = int_to_ptr.vmem [resolvable:$true] %s63
      %69 = dma.hbm_to_vmem [thread:$0]  %s62, 16384, %s64, [#allocation13], 128, 128, 8
    $region25: #{tpu_custom_call.1} parent=1 // pred_fallthru
      _
    // Predicated region
    $region26: #{tpu_custom_call.1} parent=1 // pred_check
      _
    $region27: #{tpu_custom_call.1} parent=1 // pred_check_branch
      %71 = sbr.rel (0) target = $region29
    $region28: #{tpu_custom_call.1} parent=1 // pred_region
      %73 = vsyncadd [#allocation13], 0
      %s74 = sshll.u32 %s6, 4
      %s75 = int_to_ptr.hbm [resolvable:$true] %s74
      %s76 = sshll.u32 [#allocation14], 4
      %s77 = int_to_ptr.vmem [resolvable:$true] %s76
      %82 = dma.hbm_to_vmem [thread:$0]  %s75, 128, %s77, [#allocation13], 16, 16, 1
    $region29: #{tpu_custom_call.1} parent=1 // pred_fallthru
      _
    // Predicated region
    $region30: #{tpu_custom_call.1} parent=1 // pred_check
      _
    $region31: #{tpu_custom_call.1} parent=1 // pred_check_branch
      %84 = sbr.rel (0) target = $region33
    $region32: #{tpu_custom_call.1} parent=1 // pred_region
      %86 = dma.done [#allocation7], 128
    $region33: #{tpu_custom_call.1} parent=1 // pred_fallthru
      _
    // Predicated region
    $region34: #{tpu_custom_call.1} parent=1 // pred_check
      _
    $region35: #{tpu_custom_call.1} parent=1 // pred_check_branch
      %88 = sbr.rel (0) target = $region37
    $region36: #{tpu_custom_call.1} parent=1 // pred_region
      %90 = dma.done [#allocation10], 2048
    $region37: #{tpu_custom_call.1} parent=1 // pred_fallthru
      _
    // Predicated region
    $region38: #{tpu_custom_call.1} parent=1 // pred_check
      _
    $region39: #{tpu_custom_call.1} parent=1 // pred_check_branch
      %92 = sbr.rel (0) target = $region41
    $region40: #{tpu_custom_call.1} parent=1 // pred_region
      %94 = dma.done [#allocation10], 2048
    $region41: #{tpu_custom_call.1} parent=1 // pred_fallthru
      _
    // Predicated region
    $region42: #{tpu_custom_call.1} parent=1 // pred_check
      _
    $region43: #{tpu_custom_call.1} parent=1 // pred_check_branch
      %96 = sbr.rel (0) target = $region45
    $region44: #{tpu_custom_call.1} parent=1 // pred_region
      %98 = dma.done [#allocation13], 16384
    $region45: #{tpu_custom_call.1} parent=1 // pred_fallthru
      _
    // Predicated region
    $region46: #{tpu_custom_call.1} parent=1 // pred_check
      _
    $region47: #{tpu_custom_call.1} parent=1 // pred_check_branch
      %100 = sbr.rel (0) target = $region49
    $region48: #{tpu_custom_call.1} parent=1 // pred_region
      %102 = dma.done [#allocation13], 128
    $region49: #{tpu_custom_call.1} parent=1 // pred_fallthru
      _
    %p103 = scmp.eq.s32.totalorder 0, 0
    // Predicated region
    $region50: #{tpu_custom_call.1} parent=1 // pred_check
      %p104 = pneg %p103
    $region51: #{tpu_custom_call.1} parent=1 // pred_check_branch
      %106 = sbr.rel (%p104) target = $region53
    $region52: #{tpu_custom_call.1} parent=1 // pred_region
      %v107 = vld [vmem:[#allocation6] sm:$0xff]
      %v108 = vld [vmem:[#allocation9] sm:$0xff]
      %v109 = vld [vmem:[#allocation9 + $0x8] sm:$0xff]
      %v110 = vld [vmem:[#allocation9 + $0x10] sm:$0xff]
      %v111 = vld [vmem:[#allocation9 + $0x18] sm:$0xff]
      %v112 = vld [vmem:[#allocation9 + $0x20] sm:$0xff]
      %v113 = vld [vmem:[#allocation9 + $0x28] sm:$0xff]
      %v114 = vld [vmem:[#allocation9 + $0x30] sm:$0xff]
      %v115 = vld [vmem:[#allocation9 + $0x38] sm:$0xff]
      %v116 = vld [vmem:[#allocation9 + $0x40] sm:$0xff]
      %v117 = vld [vmem:[#allocation9 + $0x48] sm:$0xff]
      %v118 = vld [vmem:[#allocation9 + $0x50] sm:$0xff]
      %v119 = vld [vmem:[#allocation9 + $0x58] sm:$0xff]
      %v120 = vld [vmem:[#allocation9 + $0x60] sm:$0xff]
      %v121 = vld [vmem:[#allocation9 + $0x68] sm:$0xff]
      %v122 = vld [vmem:[#allocation9 + $0x70] sm:$0xff]
      %v123 = vld [vmem:[#allocation9 + $0x78] sm:$0xff]
      %v124 = vld [vmem:[%s2] sm:$0x1]
      %v126 = vperm.slane %v124, 0
      %128 = vmatpush.msra.mxu0 %v123
      %129 = vmatpush.msra.mxu0 %v122
      %130 = vmatpush.msra.mxu0 %v121
      %131 = vmatpush.msra.mxu0 %v120
      %132 = vmatpush.msra.mxu0 %v119
      %133 = vmatpush.msra.mxu0 %v118
      %134 = vmatpush.msra.mxu0 %v117
      %135 = vmatpush.msra.mxu0 %v116
      %136 = vmatpush.msra.mxu0 %v115
      %137 = vmatpush.msra.mxu0 %v114
      %138 = vmatpush.msra.mxu0 %v113
      %139 = vmatpush.msra.mxu0 %v112
      %140 = vmatpush.msra.mxu0 %v111
      %141 = vmatpush.msra.mxu0 %v110
      %142 = vmatpush.msra.mxu0 %v109
      %143 = vmatpush.msra.mxu0 %v108
      %144 = vmatmul.f32.gmra.mxu0 %v107
      %v145 = vpop.f32.mrf.mxu0
      %v146 = vadd.f32 %v126, %v145
      %147 = vdwg.mxu0
      %v148 = vmul.f32 %v146, 0.17677669
      %v150 = vrot.slane %v148, 1
      %v151 = vrot.slane %v148, 2
      %v152 = vrot.slane %v148, 3
      %v153 = vrot.slane %v148, 4
      %v154 = vrot.slane %v148, 5
      %v155 = vrot.slane %v148, 6
      %v156 = vrot.slane %v148, 7
      %164 = vst [vmem:[#allocation2] sm:$0x1] %v148
      %165 = vst [vmem:[#allocation2 + $0x1] sm:$0x1] %v150
      %166 = vst [vmem:[#allocation2 + $0x2] sm:$0x1] %v151
      %167 = vst [vmem:[#allocation2 + $0x3] sm:$0x1] %v152
      %168 = vst [vmem:[#allocation2 + $0x4] sm:$0x1] %v153
      %169 = vst [vmem:[#allocation2 + $0x5] sm:$0x1] %v154
      %170 = vst [vmem:[#allocation2 + $0x6] sm:$0x1] %v155
      %171 = vst [vmem:[#allocation2 + $0x7] sm:$0x1] %v156
      %vm172 = vcmask 0
      %173 = vst.msk [vmem:[#allocation3] sm:$0x1] %vm172, -inf
      %174 = vst.msk [vmem:[#allocation3 + $0x1] sm:$0x1] %vm172, -inf
      %175 = vst.msk [vmem:[#allocation3 + $0x2] sm:$0x1] %vm172, -inf
      %176 = vst.msk [vmem:[#allocation3 + $0x3] sm:$0x1] %vm172, -inf
      %177 = vst.msk [vmem:[#allocation3 + $0x4] sm:$0x1] %vm172, -inf
      %178 = vst.msk [vmem:[#allocation3 + $0x5] sm:$0x1] %vm172, -inf
      %179 = vst.msk [vmem:[#allocation3 + $0x6] sm:$0x1] %vm172, -inf
      %180 = vst.msk [vmem:[#allocation3 + $0x7] sm:$0x1] %vm172, -inf
      %181 = vst.msk [vmem:[#allocation4] sm:$0x1] %vm172, 0.0
      %182 = vst.msk [vmem:[#allocation4 + $0x1] sm:$0x1] %vm172, 0.0
      %183 = vst.msk [vmem:[#allocation4 + $0x2] sm:$0x1] %vm172, 0.0
      %184 = vst.msk [vmem:[#allocation4 + $0x3] sm:$0x1] %vm172, 0.0
      %185 = vst.msk [vmem:[#allocation4 + $0x4] sm:$0x1] %vm172, 0.0
      %186 = vst.msk [vmem:[#allocation4 + $0x5] sm:$0x1] %vm172, 0.0
      %187 = vst.msk [vmem:[#allocation4 + $0x6] sm:$0x1] %vm172, 0.0
      %188 = vst.msk [vmem:[#allocation4 + $0x7] sm:$0x1] %vm172, 0.0
      %189 = vst [vmem:[#allocation5] sm:$0x1] 0.0
      %190 = vst [vmem:[#allocation5 + $0x1] sm:$0x1] 0.0
      %191 = vst [vmem:[#allocation5 + $0x2] sm:$0x1] 0.0
      %192 = vst [vmem:[#allocation5 + $0x3] sm:$0x1] 0.0
      %193 = vst [vmem:[#allocation5 + $0x4] sm:$0x1] 0.0
      %194 = vst [vmem:[#allocation5 + $0x5] sm:$0x1] 0.0
      %195 = vst [vmem:[#allocation5 + $0x6] sm:$0x1] 0.0
      %196 = vst [vmem:[#allocation5 + $0x7] sm:$0x1] 0.0
    $region53: #{tpu_custom_call.1} parent=1 // pred_fallthru
      _
    %v197 = vld [vmem:[#allocation12] sm:$0xff]
    %v198 = vld [vmem:[#allocation12 + $0x8] sm:$0xff]
    %v199 = vld [vmem:[#allocation12 + $0x10] sm:$0xff]
    %v200 = vld [vmem:[#allocation12 + $0x18] sm:$0xff]
    %v201 = vld [vmem:[#allocation12 + $0x20] sm:$0xff]
    %v202 = vld [vmem:[#allocation12 + $0x28] sm:$0xff]
    %v203 = vld [vmem:[#allocation12 + $0x30] sm:$0xff]
    %v204 = vld [vmem:[#allocation12 + $0x38] sm:$0xff]
    %v205 = vld [vmem:[#allocation12 + $0x40] sm:$0xff]
    %v206 = vld [vmem:[#allocation12 + $0x48] sm:$0xff]
    %v207 = vld [vmem:[#allocation12 + $0x50] sm:$0xff]
    %v208 = vld [vmem:[#allocation12 + $0x58] sm:$0xff]
    %v209 = vld [vmem:[#allocation12 + $0x60] sm:$0xff]
    %v210 = vld [vmem:[#allocation12 + $0x68] sm:$0xff]
    %v211 = vld [vmem:[#allocation12 + $0x70] sm:$0xff]
    %v212 = vld [vmem:[#allocation12 + $0x78] sm:$0xff]
    %v213 = vld [vmem:[#allocation12 + $0x80] sm:$0xff]
    %v214 = vld [vmem:[#allocation12 + $0x88] sm:$0xff]
    %v215 = vld [vmem:[#allocation12 + $0x90] sm:$0xff]
    %v216 = vld [vmem:[#allocation12 + $0x98] sm:$0xff]
    %v217 = vld [vmem:[#allocation12 + $0xa0] sm:$0xff]
    %v218 = vld [vmem:[#allocation12 + $0xa8] sm:$0xff]
    %v219 = vld [vmem:[#allocation12 + $0xb0] sm:$0xff]
    %v220 = vld [vmem:[#allocation12 + $0xb8] sm:$0xff]
    %v221 = vld [vmem:[#allocation12 + $0xc0] sm:$0xff]
    %v222 = vld [vmem:[#allocation12 + $0xc8] sm:$0xff]
    %v223 = vld [vmem:[#allocation12 + $0xd0] sm:$0xff]
    %v224 = vld [vmem:[#allocation12 + $0xd8] sm:$0xff]
    %v225 = vld [vmem:[#allocation12 + $0xe0] sm:$0xff]
    %v226 = vld [vmem:[#allocation12 + $0xe8] sm:$0xff]
    %v227 = vld [vmem:[#allocation12 + $0xf0] sm:$0xff]
    %v228 = vld [vmem:[#allocation12 + $0xf8] sm:$0xff]
    %v229 = vld [vmem:[#allocation12 + $0x100] sm:$0xff]
    %v230 = vld [vmem:[#allocation12 + $0x108] sm:$0xff]
    %v231 = vld [vmem:[#allocation12 + $0x110] sm:$0xff]
    %v232 = vld [vmem:[#allocation12 + $0x118] sm:$0xff]
    %v233 = vld [vmem:[#allocation12 + $0x120] sm:$0xff]
    %v234 = vld [vmem:[#allocation12 + $0x128] sm:$0xff]
    %v235 = vld [vmem:[#allocation12 + $0x130] sm:$0xff]
    %v236 = vld [vmem:[#allocation12 + $0x138] sm:$0xff]
    %v237 = vld [vmem:[#allocation12 + $0x140] sm:$0xff]
    %v238 = vld [vmem:[#allocation12 + $0x148] sm:$0xff]
    %v239 = vld [vmem:[#allocation12 + $0x150] sm:$0xff]
    %v240 = vld [vmem:[#allocation12 + $0x158] sm:$0xff]
    %v241 = vld [vmem:[#allocation12 + $0x160] sm:$0xff]
    %v242 = vld [vmem:[#allocation12 + $0x168] sm:$0xff]
    %v243 = vld [vmem:[#allocation12 + $0x170] sm:$0xff]
    %v244 = vld [vmem:[#allocation12 + $0x178] sm:$0xff]
    %v245 = vld [vmem:[#allocation12 + $0x180] sm:$0xff]
    %v246 = vld [vmem:[#allocation12 + $0x188] sm:$0xff]
    %v247 = vld [vmem:[#allocation12 + $0x190] sm:$0xff]
    %v248 = vld [vmem:[#allocation12 + $0x198] sm:$0xff]
    %v249 = vld [vmem:[#allocation12 + $0x1a0] sm:$0xff]
    %v250 = vld [vmem:[#allocation12 + $0x1a8] sm:$0xff]
    %v251 = vld [vmem:[#allocation12 + $0x1b0] sm:$0xff]
    %v252 = vld [vmem:[#allocation12 + $0x1b8] sm:$0xff]
    %v253 = vld [vmem:[#allocation12 + $0x1c0] sm:$0xff]
    %v254 = vld [vmem:[#allocation12 + $0x1c8] sm:$0xff]
    %v255 = vld [vmem:[#allocation12 + $0x1d0] sm:$0xff]
    %v256 = vld [vmem:[#allocation12 + $0x1d8] sm:$0xff]
    %v257 = vld [vmem:[#allocation12 + $0x1e0] sm:$0xff]
    %v258 = vld [vmem:[#allocation12 + $0x1e8] sm:$0xff]
    %v259 = vld [vmem:[#allocation12 + $0x1f0] sm:$0xff]
    %v260 = vld [vmem:[#allocation12 + $0x1f8] sm:$0xff]
    %v261 = vld [vmem:[#allocation12 + $0x200] sm:$0xff]
    %v262 = vld [vmem:[#allocation12 + $0x208] sm:$0xff]
    %v263 = vld [vmem:[#allocation12 + $0x210] sm:$0xff]
    %v264 = vld [vmem:[#allocation12 + $0x218] sm:$0xff]
    %v265 = vld [vmem:[#allocation12 + $0x220] sm:$0xff]
    %v266 = vld [vmem:[#allocation12 + $0x228] sm:$0xff]
    %v267 = vld [vmem:[#allocation12 + $0x230] sm:$0xff]
    %v268 = vld [vmem:[#allocation12 + $0x238] sm:$0xff]
    %v269 = vld [vmem:[#allocation12 + $0x240] sm:$0xff]
    %v270 = vld [vmem:[#allocation12 + $0x248] sm:$0xff]
    %v271 = vld [vmem:[#allocation12 + $0x250] sm:$0xff]
    %v272 = vld [vmem:[#allocation12 + $0x258] sm:$0xff]
    %v273 = vld [vmem:[#allocation12 + $0x260] sm:$0xff]
    %v274 = vld [vmem:[#allocation12 + $0x268] sm:$0xff]
    %v275 = vld [vmem:[#allocation12 + $0x270] sm:$0xff]
    %v276 = vld [vmem:[#allocation12 + $0x278] sm:$0xff]
    %v277 = vld [vmem:[#allocation12 + $0x280] sm:$0xff]
    %v278 = vld [vmem:[#allocation12 + $0x288] sm:$0xff]
    %v279 = vld [vmem:[#allocation12 + $0x290] sm:$0xff]
    %v280 = vld [vmem:[#allocation12 + $0x298] sm:$0xff]
    %v281 = vld [vmem:[#allocation12 + $0x2a0] sm:$0xff]
    %v282 = vld [vmem:[#allocation12 + $0x2a8] sm:$0xff]
    %v283 = vld [vmem:[#allocation12 + $0x2b0] sm:$0xff]
    %v284 = vld [vmem:[#allocation12 + $0x2b8] sm:$0xff]
    %v285 = vld [vmem:[#allocation12 + $0x2c0] sm:$0xff]
    %v286 = vld [vmem:[#allocation12 + $0x2c8] sm:$0xff]
    %v287 = vld [vmem:[#allocation12 + $0x2d0] sm:$0xff]
    %v288 = vld [vmem:[#allocation12 + $0x2d8] sm:$0xff]
    %v289 = vld [vmem:[#allocation12 + $0x2e0] sm:$0xff]
    %v290 = vld [vmem:[#allocation12 + $0x2e8] sm:$0xff]
    %v291 = vld [vmem:[#allocation12 + $0x2f0] sm:$0xff]
    %v292 = vld [vmem:[#allocation12 + $0x2f8] sm:$0xff]
    %v293 = vld [vmem:[#allocation12 + $0x300] sm:$0xff]
    %v294 = vld [vmem:[#allocation12 + $0x308] sm:$0xff]
    %v295 = vld [vmem:[#allocation12 + $0x310] sm:$0xff]
    %v296 = vld [vmem:[#allocation12 + $0x318] sm:$0xff]
    %v297 = vld [vmem:[#allocation12 + $0x320] sm:$0xff]
    %v298 = vld [vmem:[#allocation12 + $0x328] sm:$0xff]
    %v299 = vld [vmem:[#allocation12 + $0x330] sm:$0xff]
    %v300 = vld [vmem:[#allocation12 + $0x338] sm:$0xff]
    %v301 = vld [vmem:[#allocation12 + $0x340] sm:$0xff]
    %v302 = vld [vmem:[#allocation12 + $0x348] sm:$0xff]
    %v303 = vld [vmem:[#allocation12 + $0x350] sm:$0xff]
    %v304 = vld [vmem:[#allocation12 + $0x358] sm:$0xff]
    %v305 = vld [vmem:[#allocation12 + $0x360] sm:$0xff]
    %v306 = vld [vmem:[#allocation12 + $0x368] sm:$0xff]
    %v307 = vld [vmem:[#allocation12 + $0x370] sm:$0xff]
    %v308 = vld [vmem:[#allocation12 + $0x378] sm:$0xff]
    %v309 = vld [vmem:[#allocation12 + $0x380] sm:$0xff]
    %v310 = vld [vmem:[#allocation12 + $0x388] sm:$0xff]
    %v311 = vld [vmem:[#allocation12 + $0x390] sm:$0xff]
    %v312 = vld [vmem:[#allocation12 + $0x398] sm:$0xff]
    %v313 = vld [vmem:[#allocation12 + $0x3a0] sm:$0xff]
    %v314 = vld [vmem:[#allocation12 + $0x3a8] sm:$0xff]
    %v315 = vld [vmem:[#allocation12 + $0x3b0] sm:$0xff]
    %v316 = vld [vmem:[#allocation12 + $0x3b8] sm:$0xff]
    %v317 = vld [vmem:[#allocation12 + $0x3c0] sm:$0xff]
    %v318 = vld [vmem:[#allocation12 + $0x3c8] sm:$0xff]
    %v319 = vld [vmem:[#allocation12 + $0x3d0] sm:$0xff]
    %v320 = vld [vmem:[#allocation12 + $0x3d8] sm:$0xff]
    %v321 = vld [vmem:[#allocation12 + $0x3e0] sm:$0xff]
    %v322 = vld [vmem:[#allocation12 + $0x3e8] sm:$0xff]
    %v323 = vld [vmem:[#allocation12 + $0x3f0] sm:$0xff]
    %v324 = vld [vmem:[#allocation12 + $0x3f8] sm:$0xff]
    %v325 = vld [vmem:[#allocation11] sm:$0xff]
    %v326 = vld [vmem:[#allocation11 + $0x8] sm:$0xff]
    %v327 = vld [vmem:[#allocation11 + $0x10] sm:$0xff]
    %v328 = vld [vmem:[#allocation11 + $0x18] sm:$0xff]
    %v329 = vld [vmem:[#allocation11 + $0x20] sm:$0xff]
    %v330 = vld [vmem:[#allocation11 + $0x28] sm:$0xff]
    %v331 = vld [vmem:[#allocation11 + $0x30] sm:$0xff]
    %v332 = vld [vmem:[#allocation11 + $0x38] sm:$0xff]
    %v333 = vld [vmem:[#allocation11 + $0x40] sm:$0xff]
    %v334 = vld [vmem:[#allocation11 + $0x48] sm:$0xff]
    %v335 = vld [vmem:[#allocation11 + $0x50] sm:$0xff]
    %v336 = vld [vmem:[#allocation11 + $0x58] sm:$0xff]
    %v337 = vld [vmem:[#allocation11 + $0x60] sm:$0xff]
    %v338 = vld [vmem:[#allocation11 + $0x68] sm:$0xff]
    %v339 = vld [vmem:[#allocation11 + $0x70] sm:$0xff]
    %v340 = vld [vmem:[#allocation11 + $0x78] sm:$0xff]
    %v341 = vld [vmem:[%s4] sm:$0x1]
    %v343 = vperm.slane %v341, 0
    %345 = vmatpush.msra.mxu0 %v340
    %346 = vmatpush.msra.mxu0 %v339
    %347 = vmatpush.msra.mxu0 %v338
    %348 = vmatpush.msra.mxu0 %v337
    %349 = vmatpush.msra.mxu0 %v336
    %350 = vmatpush.msra.mxu0 %v335
    %351 = vmatpush.msra.mxu0 %v334
    %352 = vmatpush.msra.mxu0 %v333
    %353 = vmatpush.msra.mxu0 %v332
    %354 = vmatpush.msra.mxu0 %v331
    %355 = vmatpush.msra.mxu0 %v330
    %356 = vmatpush.msra.mxu0 %v329
    %357 = vmatpush.msra.mxu0 %v328
    %358 = vmatpush.msra.mxu0 %v327
    %359 = vmatpush.msra.mxu0 %v326
    %360 = vmatpush.msra.mxu0 %v325
    %361 = vmatmul.f32.gmra.mxu0 %v197
    %v362 = vpop.f32.mrf.mxu0
    %v363 = vadd.f32 %v343, %v362
    %364 = vmatmul.f32.gmra.mxu0 %v198
    %v365 = vpop.f32.mrf.mxu0
    %v366 = vadd.f32 %v343, %v365
    %367 = vmatmul.f32.gmra.mxu0 %v199
    %v368 = vpop.f32.mrf.mxu0
    %v369 = vadd.f32 %v343, %v368
    %370 = vmatmul.f32.gmra.mxu0 %v200
    %v371 = vpop.f32.mrf.mxu0
    %v372 = vadd.f32 %v343, %v371
    %373 = vmatmul.f32.gmra.mxu0 %v201
    %v374 = vpop.f32.mrf.mxu0
    %v375 = vadd.f32 %v343, %v374
    %376 = vmatmul.f32.gmra.mxu0 %v202
    %v377 = vpop.f32.mrf.mxu0
    %v378 = vadd.f32 %v343, %v377
    %379 = vmatmul.f32.gmra.mxu0 %v203
    %v380 = vpop.f32.mrf.mxu0
    %v381 = vadd.f32 %v343, %v380
    %382 = vmatmul.f32.gmra.mxu0 %v204
    %v383 = vpop.f32.mrf.mxu0
    %v384 = vadd.f32 %v343, %v383
    %385 = vmatmul.f32.gmra.mxu0 %v205
    %v386 = vpop.f32.mrf.mxu0
    %v387 = vadd.f32 %v343, %v386
    %388 = vmatmul.f32.gmra.mxu0 %v206
    %v389 = vpop.f32.mrf.mxu0
    %v390 = vadd.f32 %v343, %v389
    %391 = vmatmul.f32.gmra.mxu0 %v207
    %v392 = vpop.f32.mrf.mxu0
    %v393 = vadd.f32 %v343, %v392
    %394 = vmatmul.f32.gmra.mxu0 %v208
    %v395 = vpop.f32.mrf.mxu0
    %v396 = vadd.f32 %v343, %v395
    %397 = vmatmul.f32.gmra.mxu0 %v209
    %v398 = vpop.f32.mrf.mxu0
    %v399 = vadd.f32 %v343, %v398
    %400 = vmatmul.f32.gmra.mxu0 %v210
    %v401 = vpop.f32.mrf.mxu0
    %v402 = vadd.f32 %v343, %v401
    %403 = vmatmul.f32.gmra.mxu0 %v211
    %v404 = vpop.f32.mrf.mxu0
    %v405 = vadd.f32 %v343, %v404
    %406 = vmatmul.f32.gmra.mxu0 %v212
    %v407 = vpop.f32.mrf.mxu0
    %v408 = vadd.f32 %v343, %v407
    %409 = vmatmul.f32.gmra.mxu0 %v213
    %v410 = vpop.f32.mrf.mxu0
    %v411 = vadd.f32 %v343, %v410
    %412 = vmatmul.f32.gmra.mxu0 %v214
    %v413 = vpop.f32.mrf.mxu0
    %v414 = vadd.f32 %v343, %v413
    %415 = vmatmul.f32.gmra.mxu0 %v215
    %v416 = vpop.f32.mrf.mxu0
    %v417 = vadd.f32 %v343, %v416
    %418 = vmatmul.f32.gmra.mxu0 %v216
    %v419 = vpop.f32.mrf.mxu0
    %v420 = vadd.f32 %v343, %v419
    %421 = vmatmul.f32.gmra.mxu0 %v217
    %v422 = vpop.f32.mrf.mxu0
    %v423 = vadd.f32 %v343, %v422
    %424 = vmatmul.f32.gmra.mxu0 %v218
    %v425 = vpop.f32.mrf.mxu0
    %v426 = vadd.f32 %v343, %v425
    %427 = vmatmul.f32.gmra.mxu0 %v219
    %v428 = vpop.f32.mrf.mxu0
    %v429 = vadd.f32 %v343, %v428
    %430 = vmatmul.f32.gmra.mxu0 %v220
    %v431 = vpop.f32.mrf.mxu0
    %v432 = vadd.f32 %v343, %v431
    %433 = vmatmul.f32.gmra.mxu0 %v221
    %v434 = vpop.f32.mrf.mxu0
    %v435 = vadd.f32 %v343, %v434
    %436 = vmatmul.f32.gmra.mxu0 %v222
    %v437 = vpop.f32.mrf.mxu0
    %v438 = vadd.f32 %v343, %v437
    %439 = vmatmul.f32.gmra.mxu0 %v223
    %v440 = vpop.f32.mrf.mxu0
    %v441 = vadd.f32 %v343, %v440
    %442 = vmatmul.f32.gmra.mxu0 %v224
    %v443 = vpop.f32.mrf.mxu0
    %v444 = vadd.f32 %v343, %v443
    %445 = vmatmul.f32.gmra.mxu0 %v225
    %v446 = vpop.f32.mrf.mxu0
    %v447 = vadd.f32 %v343, %v446
    %448 = vmatmul.f32.gmra.mxu0 %v226
    %v449 = vpop.f32.mrf.mxu0
    %v450 = vadd.f32 %v343, %v449
    %451 = vmatmul.f32.gmra.mxu0 %v227
    %v452 = vpop.f32.mrf.mxu0
    %v453 = vadd.f32 %v343, %v452
    %454 = vmatmul.f32.gmra.mxu0 %v228
    %v455 = vpop.f32.mrf.mxu0
    %v456 = vadd.f32 %v343, %v455
    %457 = vmatmul.f32.gmra.mxu0 %v229
    %v458 = vpop.f32.mrf.mxu0
    %v459 = vadd.f32 %v343, %v458
    %460 = vmatmul.f32.gmra.mxu0 %v230
    %v461 = vpop.f32.mrf.mxu0
    %v462 = vadd.f32 %v343, %v461
    %463 = vmatmul.f32.gmra.mxu0 %v231
    %v464 = vpop.f32.mrf.mxu0
    %v465 = vadd.f32 %v343, %v464
    %466 = vmatmul.f32.gmra.mxu0 %v232
    %v467 = vpop.f32.mrf.mxu0
    %v468 = vadd.f32 %v343, %v467
    %469 = vmatmul.f32.gmra.mxu0 %v233
    %v470 = vpop.f32.mrf.mxu0
    %v471 = vadd.f32 %v343, %v470
    %472 = vmatmul.f32.gmra.mxu0 %v234
    %v473 = vpop.f32.mrf.mxu0
    %v474 = vadd.f32 %v343, %v473
    %475 = vmatmul.f32.gmra.mxu0 %v235
    %v476 = vpop.f32.mrf.mxu0
    %v477 = vadd.f32 %v343, %v476
    %478 = vmatmul.f32.gmra.mxu0 %v236
    %v479 = vpop.f32.mrf.mxu0
    %v480 = vadd.f32 %v343, %v479
    %481 = vmatmul.f32.gmra.mxu0 %v237
    %v482 = vpop.f32.mrf.mxu0
    %v483 = vadd.f32 %v343, %v482
    %484 = vmatmul.f32.gmra.mxu0 %v238
    %v485 = vpop.f32.mrf.mxu0
    %v486 = vadd.f32 %v343, %v485
    %487 = vmatmul.f32.gmra.mxu0 %v239
    %v488 = vpop.f32.mrf.mxu0
    %v489 = vadd.f32 %v343, %v488
    %490 = vmatmul.f32.gmra.mxu0 %v240
    %v491 = vpop.f32.mrf.mxu0
    %v492 = vadd.f32 %v343, %v491
    %493 = vmatmul.f32.gmra.mxu0 %v241
    %v494 = vpop.f32.mrf.mxu0
    %v495 = vadd.f32 %v343, %v494
    %496 = vmatmul.f32.gmra.mxu0 %v242
    %v497 = vpop.f32.mrf.mxu0
    %v498 = vadd.f32 %v343, %v497
    %499 = vmatmul.f32.gmra.mxu0 %v243
    %v500 = vpop.f32.mrf.mxu0
    %v501 = vadd.f32 %v343, %v500
    %502 = vmatmul.f32.gmra.mxu0 %v244
    %v503 = vpop.f32.mrf.mxu0
    %v504 = vadd.f32 %v343, %v503
    %505 = vmatmul.f32.gmra.mxu0 %v245
    %v506 = vpop.f32.mrf.mxu0
    %v507 = vadd.f32 %v343, %v506
    %508 = vmatmul.f32.gmra.mxu0 %v246
    %v509 = vpop.f32.mrf.mxu0
    %v510 = vadd.f32 %v343, %v509
    %511 = vmatmul.f32.gmra.mxu0 %v247
    %v512 = vpop.f32.mrf.mxu0
    %v513 = vadd.f32 %v343, %v512
    %514 = vmatmul.f32.gmra.mxu0 %v248
    %v515 = vpop.f32.mrf.mxu0
    %v516 = vadd.f32 %v343, %v515
    %517 = vmatmul.f32.gmra.mxu0 %v249
    %v518 = vpop.f32.mrf.mxu0
    %v519 = vadd.f32 %v343, %v518
    %520 = vmatmul.f32.gmra.mxu0 %v250
    %v521 = vpop.f32.mrf.mxu0
    %v522 = vadd.f32 %v343, %v521
    %523 = vmatmul.f32.gmra.mxu0 %v251
    %v524 = vpop.f32.mrf.mxu0
    %v525 = vadd.f32 %v343, %v524
    %526 = vmatmul.f32.gmra.mxu0 %v252
    %v527 = vpop.f32.mrf.mxu0
    %v528 = vadd.f32 %v343, %v527
    %529 = vmatmul.f32.gmra.mxu0 %v253
    %v530 = vpop.f32.mrf.mxu0
    %v531 = vadd.f32 %v343, %v530
    %532 = vmatmul.f32.gmra.mxu0 %v254
    %v533 = vpop.f32.mrf.mxu0
    %v534 = vadd.f32 %v343, %v533
    %535 = vmatmul.f32.gmra.mxu0 %v255
    %v536 = vpop.f32.mrf.mxu0
    %v537 = vadd.f32 %v343, %v536
    %538 = vmatmul.f32.gmra.mxu0 %v256
    %v539 = vpop.f32.mrf.mxu0
    %v540 = vadd.f32 %v343, %v539
    %541 = vmatmul.f32.gmra.mxu0 %v257
    %v542 = vpop.f32.mrf.mxu0
    %v543 = vadd.f32 %v343, %v542
    %544 = vmatmul.f32.gmra.mxu0 %v258
    %v545 = vpop.f32.mrf.mxu0
    %v546 = vadd.f32 %v343, %v545
    %547 = vmatmul.f32.gmra.mxu0 %v259
    %v548 = vpop.f32.mrf.mxu0
    %v549 = vadd.f32 %v343, %v548
    %550 = vmatmul.f32.gmra.mxu0 %v260
    %v551 = vpop.f32.mrf.mxu0
    %v552 = vadd.f32 %v343, %v551
    %553 = vmatmul.f32.gmra.mxu0 %v261
    %v554 = vpop.f32.mrf.mxu0
    %v555 = vadd.f32 %v343, %v554
    %556 = vmatmul.f32.gmra.mxu0 %v262
    %v557 = vpop.f32.mrf.mxu0
    %v558 = vadd.f32 %v343, %v557
    %559 = vmatmul.f32.gmra.mxu0 %v263
    %v560 = vpop.f32.mrf.mxu0
    %v561 = vadd.f32 %v343, %v560
    %562 = vmatmul.f32.gmra.mxu0 %v264
    %v563 = vpop.f32.mrf.mxu0
    %v564 = vadd.f32 %v343, %v563
    %565 = vmatmul.f32.gmra.mxu0 %v265
    %v566 = vpop.f32.mrf.mxu0
    %v567 = vadd.f32 %v343, %v566
    %568 = vmatmul.f32.gmra.mxu0 %v266
    %v569 = vpop.f32.mrf.mxu0
    %v570 = vadd.f32 %v343, %v569
    %571 = vmatmul.f32.gmra.mxu0 %v267
    %v572 = vpop.f32.mrf.mxu0
    %v573 = vadd.f32 %v343, %v572
    %574 = vmatmul.f32.gmra.mxu0 %v268
    %v575 = vpop.f32.mrf.mxu0
    %v576 = vadd.f32 %v343, %v575
    %577 = vmatmul.f32.gmra.mxu0 %v269
    %v578 = vpop.f32.mrf.mxu0
    %v579 = vadd.f32 %v343, %v578
    %580 = vmatmul.f32.gmra.mxu0 %v270
    %v581 = vpop.f32.mrf.mxu0
    %v582 = vadd.f32 %v343, %v581
    %583 = vmatmul.f32.gmra.mxu0 %v271
    %v584 = vpop.f32.mrf.mxu0
    %v585 = vadd.f32 %v343, %v584
    %586 = vmatmul.f32.gmra.mxu0 %v272
    %v587 = vpop.f32.mrf.mxu0
    %v588 = vadd.f32 %v343, %v587
    %589 = vmatmul.f32.gmra.mxu0 %v273
    %v590 = vpop.f32.mrf.mxu0
    %v591 = vadd.f32 %v343, %v590
    %592 = vmatmul.f32.gmra.mxu0 %v274
    %v593 = vpop.f32.mrf.mxu0
    %v594 = vadd.f32 %v343, %v593
    %595 = vmatmul.f32.gmra.mxu0 %v275
    %v596 = vpop.f32.mrf.mxu0
    %v597 = vadd.f32 %v343, %v596
    %598 = vmatmul.f32.gmra.mxu0 %v276
    %v599 = vpop.f32.mrf.mxu0
    %v600 = vadd.f32 %v343, %v599
    %601 = vmatmul.f32.gmra.mxu0 %v277
    %v602 = vpop.f32.mrf.mxu0
    %v603 = vadd.f32 %v343, %v602
    %604 = vmatmul.f32.gmra.mxu0 %v278
    %v605 = vpop.f32.mrf.mxu0
    %v606 = vadd.f32 %v343, %v605
    %607 = vmatmul.f32.gmra.mxu0 %v279
    %v608 = vpop.f32.mrf.mxu0
    %v609 = vadd.f32 %v343, %v608
    %610 = vmatmul.f32.gmra.mxu0 %v280
    %v611 = vpop.f32.mrf.mxu0
    %v612 = vadd.f32 %v343, %v611
    %613 = vmatmul.f32.gmra.mxu0 %v281
    %v614 = vpop.f32.mrf.mxu0
    %v615 = vadd.f32 %v343, %v614
    %616 = vmatmul.f32.gmra.mxu0 %v282
    %v617 = vpop.f32.mrf.mxu0
    %v618 = vadd.f32 %v343, %v617
    %619 = vmatmul.f32.gmra.mxu0 %v283
    %v620 = vpop.f32.mrf.mxu0
    %v621 = vadd.f32 %v343, %v620
    %622 = vmatmul.f32.gmra.mxu0 %v284
    %v623 = vpop.f32.mrf.mxu0
    %v624 = vadd.f32 %v343, %v623
    %625 = vmatmul.f32.gmra.mxu0 %v285
    %v626 = vpop.f32.mrf.mxu0
    %v627 = vadd.f32 %v343, %v626
    %628 = vmatmul.f32.gmra.mxu0 %v286
    %v629 = vpop.f32.mrf.mxu0
    %v630 = vadd.f32 %v343, %v629
    %631 = vmatmul.f32.gmra.mxu0 %v287
    %v632 = vpop.f32.mrf.mxu0
    %v633 = vadd.f32 %v343, %v632
    %634 = vmatmul.f32.gmra.mxu0 %v288
    %v635 = vpop.f32.mrf.mxu0
    %v636 = vadd.f32 %v343, %v635
    %637 = vmatmul.f32.gmra.mxu0 %v289
    %v638 = vpop.f32.mrf.mxu0
    %v639 = vadd.f32 %v343, %v638
    %640 = vmatmul.f32.gmra.mxu0 %v290
    %v641 = vpop.f32.mrf.mxu0
    %v642 = vadd.f32 %v343, %v641
    %643 = vmatmul.f32.gmra.mxu0 %v291
    %v644 = vpop.f32.mrf.mxu0
    %v645 = vadd.f32 %v343, %v644
    %646 = vmatmul.f32.gmra.mxu0 %v292
    %v647 = vpop.f32.mrf.mxu0
    %v648 = vadd.f32 %v343, %v647
    %649 = vmatmul.f32.gmra.mxu0 %v293
    %v650 = vpop.f32.mrf.mxu0
    %v651 = vadd.f32 %v343, %v650
    %652 = vmatmul.f32.gmra.mxu0 %v294
    %v653 = vpop.f32.mrf.mxu0
    %v654 = vadd.f32 %v343, %v653
    %655 = vmatmul.f32.gmra.mxu0 %v295
    %v656 = vpop.f32.mrf.mxu0
    %v657 = vadd.f32 %v343, %v656
    %658 = vmatmul.f32.gmra.mxu0 %v296
    %v659 = vpop.f32.mrf.mxu0
    %v660 = vadd.f32 %v343, %v659
    %661 = vmatmul.f32.gmra.mxu0 %v297
    %v662 = vpop.f32.mrf.mxu0
    %v663 = vadd.f32 %v343, %v662
    %664 = vmatmul.f32.gmra.mxu0 %v298
    %v665 = vpop.f32.mrf.mxu0
    %v666 = vadd.f32 %v343, %v665
    %667 = vmatmul.f32.gmra.mxu0 %v299
    %v668 = vpop.f32.mrf.mxu0
    %v669 = vadd.f32 %v343, %v668
    %670 = vmatmul.f32.gmra.mxu0 %v300
    %v671 = vpop.f32.mrf.mxu0
    %v672 = vadd.f32 %v343, %v671
    %673 = vmatmul.f32.gmra.mxu0 %v301
    %v674 = vpop.f32.mrf.mxu0
    %v675 = vadd.f32 %v343, %v674
    %676 = vmatmul.f32.gmra.mxu0 %v302
    %v677 = vpop.f32.mrf.mxu0
    %v678 = vadd.f32 %v343, %v677
    %679 = vmatmul.f32.gmra.mxu0 %v303
    %v680 = vpop.f32.mrf.mxu0
    %v681 = vadd.f32 %v343, %v680
    %682 = vmatmul.f32.gmra.mxu0 %v304
    %v683 = vpop.f32.mrf.mxu0
    %v684 = vadd.f32 %v343, %v683
    %685 = vmatmul.f32.gmra.mxu0 %v305
    %v686 = vpop.f32.mrf.mxu0
    %v687 = vadd.f32 %v343, %v686
    %688 = vmatmul.f32.gmra.mxu0 %v306
    %v689 = vpop.f32.mrf.mxu0
    %v690 = vadd.f32 %v343, %v689
    %691 = vmatmul.f32.gmra.mxu0 %v307
    %v692 = vpop.f32.mrf.mxu0
    %v693 = vadd.f32 %v343, %v692
    %694 = vmatmul.f32.gmra.mxu0 %v308
    %v695 = vpop.f32.mrf.mxu0
    %v696 = vadd.f32 %v343, %v695
    %697 = vmatmul.f32.gmra.mxu0 %v309
    %v698 = vpop.f32.mrf.mxu0
    %v699 = vadd.f32 %v343, %v698
    %700 = vmatmul.f32.gmra.mxu0 %v310
    %v701 = vpop.f32.mrf.mxu0
    %v702 = vadd.f32 %v343, %v701
    %703 = vmatmul.f32.gmra.mxu0 %v311
    %v704 = vpop.f32.mrf.mxu0
    %v705 = vadd.f32 %v343, %v704
    %706 = vmatmul.f32.gmra.mxu0 %v312
    %v707 = vpop.f32.mrf.mxu0
    %v708 = vadd.f32 %v343, %v707
    %709 = vmatmul.f32.gmra.mxu0 %v313
    %v710 = vpop.f32.mrf.mxu0
    %v711 = vadd.f32 %v343, %v710
    %712 = vmatmul.f32.gmra.mxu0 %v314
    %v713 = vpop.f32.mrf.mxu0
    %v714 = vadd.f32 %v343, %v713
    %715 = vmatmul.f32.gmra.mxu0 %v315
    %v716 = vpop.f32.mrf.mxu0
    %v717 = vadd.f32 %v343, %v716
    %718 = vmatmul.f32.gmra.mxu0 %v316
    %v719 = vpop.f32.mrf.mxu0
    %v720 = vadd.f32 %v343, %v719
    %721 = vmatmul.f32.gmra.mxu0 %v317
    %v722 = vpop.f32.mrf.mxu0
    %v723 = vadd.f32 %v343, %v722
    %724 = vmatmul.f32.gmra.mxu0 %v318
    %v725 = vpop.f32.mrf.mxu0
    %v726 = vadd.f32 %v343, %v725
    %727 = vmatmul.f32.gmra.mxu0 %v319
    %v728 = vpop.f32.mrf.mxu0
    %v729 = vadd.f32 %v343, %v728
    %730 = vmatmul.f32.gmra.mxu0 %v320
    %v731 = vpop.f32.mrf.mxu0
    %v732 = vadd.f32 %v343, %v731
    %733 = vmatmul.f32.gmra.mxu0 %v321
    %v734 = vpop.f32.mrf.mxu0
    %v735 = vadd.f32 %v343, %v734
    %736 = vmatmul.f32.gmra.mxu0 %v322
    %v737 = vpop.f32.mrf.mxu0
    %v738 = vadd.f32 %v343, %v737
    %739 = vmatmul.f32.gmra.mxu0 %v323
    %v740 = vpop.f32.mrf.mxu0
    %v741 = vadd.f32 %v343, %v740
    %742 = vmatmul.f32.gmra.mxu0 %v324
    %v743 = vpop.f32.mrf.mxu0
    %v744 = vadd.f32 %v343, %v743
    %745 = vdwg.mxu0
    %v746 = vld [vmem:[#allocation2] sm:$0x1]
    %v747 = vld [vmem:[#allocation2 + $0x1] sm:$0x1]
    %v748 = vld [vmem:[#allocation2 + $0x2] sm:$0x1]
    %v749 = vld [vmem:[#allocation2 + $0x3] sm:$0x1]
    %v750 = vld [vmem:[#allocation2 + $0x4] sm:$0x1]
    %v751 = vld [vmem:[#allocation2 + $0x5] sm:$0x1]
    %v752 = vld [vmem:[#allocation2 + $0x6] sm:$0x1]
    %v753 = vld [vmem:[#allocation2 + $0x7] sm:$0x1]
    %v754 = vld [vmem:[#allocation14] sm:$0x1]
    %v755 = vld [vmem:[#allocation14 + $0x1] sm:$0x1]
    %v756 = vld [vmem:[#allocation14 + $0x2] sm:$0x1]
    %v757 = vld [vmem:[#allocation14 + $0x3] sm:$0x1]
    %v758 = vld [vmem:[#allocation14 + $0x4] sm:$0x1]
    %v759 = vld [vmem:[#allocation14 + $0x5] sm:$0x1]
    %v760 = vld [vmem:[#allocation14 + $0x6] sm:$0x1]
    %v761 = vld [vmem:[#allocation14 + $0x7] sm:$0x1]
    %762 = vmatpush.xpose.msra.mxu0 %v408
    %763 = vmatpush.xpose.msra.mxu0 %v405
    %764 = vmatpush.xpose.msra.mxu0 %v402
    %765 = vmatpush.xpose.msra.mxu0 %v399
    %766 = vmatpush.xpose.msra.mxu0 %v396
    %767 = vmatpush.xpose.msra.mxu0 %v393
    %768 = vmatpush.xpose.msra.mxu0 %v390
    %769 = vmatpush.xpose.msra.mxu0 %v387
    %770 = vmatpush.xpose.msra.mxu0 %v384
    %771 = vmatpush.xpose.msra.mxu0 %v381
    %772 = vmatpush.xpose.msra.mxu0 %v378
    %773 = vmatpush.xpose.msra.mxu0 %v375
    %774 = vmatpush.xpose.msra.mxu0 %v372
    %775 = vmatpush.xpose.msra.mxu0 %v369
    %776 = vmatpush.xpose.msra.mxu0 %v366
    %777 = vmatpush.xpose.msra.mxu0 %v363
    %778 = vmatmul.f32.gmra.mxu0 %v746
    %v779 = vpop.f32.mrf.mxu0
    %v780 = vadd.f32 %v754, %v779
    %781 = vdwg.mxu0
    %782 = vmatpush.xpose.msra.mxu0 %v456
    %783 = vmatpush.xpose.msra.mxu0 %v453
    %784 = vmatpush.xpose.msra.mxu0 %v450
    %785 = vmatpush.xpose.msra.mxu0 %v447
    %786 = vmatpush.xpose.msra.mxu0 %v444
    %787 = vmatpush.xpose.msra.mxu0 %v441
    %788 = vmatpush.xpose.msra.mxu0 %v438
    %789 = vmatpush.xpose.msra.mxu0 %v435
    %790 = vmatpush.xpose.msra.mxu0 %v432
    %791 = vmatpush.xpose.msra.mxu0 %v429
    %792 = vmatpush.xpose.msra.mxu0 %v426
    %793 = vmatpush.xpose.msra.mxu0 %v423
    %794 = vmatpush.xpose.msra.mxu0 %v420
    %795 = vmatpush.xpose.msra.mxu0 %v417
    %796 = vmatpush.xpose.msra.mxu0 %v414
    %797 = vmatpush.xpose.msra.mxu0 %v411
    %798 = vmatmul.f32.gmra.mxu0 %v747
    %v799 = vpop.f32.mrf.mxu0
    %v800 = vadd.f32 %v755, %v799
    %801 = vdwg.mxu0
    %802 = vmatpush.xpose.msra.mxu0 %v504
    %803 = vmatpush.xpose.msra.mxu0 %v501
    %804 = vmatpush.xpose.msra.mxu0 %v498
    %805 = vmatpush.xpose.msra.mxu0 %v495
    %806 = vmatpush.xpose.msra.mxu0 %v492
    %807 = vmatpush.xpose.msra.mxu0 %v489
    %808 = vmatpush.xpose.msra.mxu0 %v486
    %809 = vmatpush.xpose.msra.mxu0 %v483
    %810 = vmatpush.xpose.msra.mxu0 %v480
    %811 = vmatpush.xpose.msra.mxu0 %v477
    %812 = vmatpush.xpose.msra.mxu0 %v474
    %813 = vmatpush.xpose.msra.mxu0 %v471
    %814 = vmatpush.xpose.msra.mxu0 %v468
    %815 = vmatpush.xpose.msra.mxu0 %v465
    %816 = vmatpush.xpose.msra.mxu0 %v462
    %817 = vmatpush.xpose.msra.mxu0 %v459
    %818 = vmatmul.f32.gmra.mxu0 %v748
    %v819 = vpop.f32.mrf.mxu0
    %v820 = vadd.f32 %v756, %v819
    %821 = vdwg.mxu0
    %822 = vmatpush.xpose.msra.mxu0 %v552
    %823 = vmatpush.xpose.msra.mxu0 %v549
    %824 = vmatpush.xpose.msra.mxu0 %v546
    %825 = vmatpush.xpose.msra.mxu0 %v543
    %826 = vmatpush.xpose.msra.mxu0 %v540
    %827 = vmatpush.xpose.msra.mxu0 %v537
    %828 = vmatpush.xpose.msra.mxu0 %v534
    %829 = vmatpush.xpose.msra.mxu0 %v531
    %830 = vmatpush.xpose.msra.mxu0 %v528
    %831 = vmatpush.xpose.msra.mxu0 %v525
    %832 = vmatpush.xpose.msra.mxu0 %v522
    %833 = vmatpush.xpose.msra.mxu0 %v519
    %834 = vmatpush.xpose.msra.mxu0 %v516
    %835 = vmatpush.xpose.msra.mxu0 %v513
    %836 = vmatpush.xpose.msra.mxu0 %v510
    %837 = vmatpush.xpose.msra.mxu0 %v507
    %838 = vmatmul.f32.gmra.mxu0 %v749
    %v839 = vpop.f32.mrf.mxu0
    %v840 = vadd.f32 %v757, %v839
    %841 = vdwg.mxu0
    %842 = vmatpush.xpose.msra.mxu0 %v600
    %843 = vmatpush.xpose.msra.mxu0 %v597
    %844 = vmatpush.xpose.msra.mxu0 %v594
    %845 = vmatpush.xpose.msra.mxu0 %v591
    %846 = vmatpush.xpose.msra.mxu0 %v588
    %847 = vmatpush.xpose.msra.mxu0 %v585
    %848 = vmatpush.xpose.msra.mxu0 %v582
    %849 = vmatpush.xpose.msra.mxu0 %v579
    %850 = vmatpush.xpose.msra.mxu0 %v576
    %851 = vmatpush.xpose.msra.mxu0 %v573
    %852 = vmatpush.xpose.msra.mxu0 %v570
    %853 = vmatpush.xpose.msra.mxu0 %v567
    %854 = vmatpush.xpose.msra.mxu0 %v564
    %855 = vmatpush.xpose.msra.mxu0 %v561
    %856 = vmatpush.xpose.msra.mxu0 %v558
    %857 = vmatpush.xpose.msra.mxu0 %v555
    %858 = vmatmul.f32.gmra.mxu0 %v750
    %v859 = vpop.f32.mrf.mxu0
    %v860 = vadd.f32 %v758, %v859
    %861 = vdwg.mxu0
    %862 = vmatpush.xpose.msra.mxu0 %v648
    %863 = vmatpush.xpose.msra.mxu0 %v645
    %864 = vmatpush.xpose.msra.mxu0 %v642
    %865 = vmatpush.xpose.msra.mxu0 %v639
    %866 = vmatpush.xpose.msra.mxu0 %v636
    %867 = vmatpush.xpose.msra.mxu0 %v633
    %868 = vmatpush.xpose.msra.mxu0 %v630
    %869 = vmatpush.xpose.msra.mxu0 %v627
    %870 = vmatpush.xpose.msra.mxu0 %v624
    %871 = vmatpush.xpose.msra.mxu0 %v621
    %872 = vmatpush.xpose.msra.mxu0 %v618
    %873 = vmatpush.xpose.msra.mxu0 %v615
    %874 = vmatpush.xpose.msra.mxu0 %v612
    %875 = vmatpush.xpose.msra.mxu0 %v609
    %876 = vmatpush.xpose.msra.mxu0 %v606
    %877 = vmatpush.xpose.msra.mxu0 %v603
    %878 = vmatmul.f32.gmra.mxu0 %v751
    %v879 = vpop.f32.mrf.mxu0
    %v880 = vadd.f32 %v759, %v879
    %881 = vdwg.mxu0
    %882 = vmatpush.xpose.msra.mxu0 %v696
    %883 = vmatpush.xpose.msra.mxu0 %v693
    %884 = vmatpush.xpose.msra.mxu0 %v690
    %885 = vmatpush.xpose.msra.mxu0 %v687
    %886 = vmatpush.xpose.msra.mxu0 %v684
    %887 = vmatpush.xpose.msra.mxu0 %v681
    %888 = vmatpush.xpose.msra.mxu0 %v678
    %889 = vmatpush.xpose.msra.mxu0 %v675
    %890 = vmatpush.xpose.msra.mxu0 %v672
    %891 = vmatpush.xpose.msra.mxu0 %v669
    %892 = vmatpush.xpose.msra.mxu0 %v666
    %893 = vmatpush.xpose.msra.mxu0 %v663
    %894 = vmatpush.xpose.msra.mxu0 %v660
    %895 = vmatpush.xpose.msra.mxu0 %v657
    %896 = vmatpush.xpose.msra.mxu0 %v654
    %897 = vmatpush.xpose.msra.mxu0 %v651
    %898 = vmatmul.f32.gmra.mxu0 %v752
    %v899 = vpop.f32.mrf.mxu0
    %v900 = vadd.f32 %v760, %v899
    %901 = vdwg.mxu0
    %902 = vmatpush.xpose.msra.mxu0 %v744
    %903 = vmatpush.xpose.msra.mxu0 %v741
    %904 = vmatpush.xpose.msra.mxu0 %v738
    %905 = vmatpush.xpose.msra.mxu0 %v735
    %906 = vmatpush.xpose.msra.mxu0 %v732
    %907 = vmatpush.xpose.msra.mxu0 %v729
    %908 = vmatpush.xpose.msra.mxu0 %v726
    %909 = vmatpush.xpose.msra.mxu0 %v723
    %910 = vmatpush.xpose.msra.mxu0 %v720
    %911 = vmatpush.xpose.msra.mxu0 %v717
    %912 = vmatpush.xpose.msra.mxu0 %v714
    %913 = vmatpush.xpose.msra.mxu0 %v711
    %914 = vmatpush.xpose.msra.mxu0 %v708
    %915 = vmatpush.xpose.msra.mxu0 %v705
    %916 = vmatpush.xpose.msra.mxu0 %v702
    %917 = vmatpush.xpose.msra.mxu0 %v699
    %918 = vmatmul.f32.gmra.mxu0 %v753
    %v919 = vpop.f32.mrf.mxu0
    %v920 = vadd.f32 %v761, %v919
    %921 = vdwg.mxu0
    %v922 = vld [vmem:[#allocation3] sm:$0x1]
    %v923 = vld [vmem:[#allocation3 + $0x1] sm:$0x1]
    %v924 = vld [vmem:[#allocation3 + $0x2] sm:$0x1]
    %v925 = vld [vmem:[#allocation3 + $0x3] sm:$0x1]
    %v926 = vld [vmem:[#allocation3 + $0x4] sm:$0x1]
    %v927 = vld [vmem:[#allocation3 + $0x5] sm:$0x1]
    %v928 = vld [vmem:[#allocation3 + $0x6] sm:$0x1]
    %v929 = vld [vmem:[#allocation3 + $0x7] sm:$0x1]
    %vm930 = vcmask 1040384
    %v931 = vsel %vm930, %v780, -inf
    %932 = vmax.xlane.f32.xlu0 %v931
    %v933 = vpop.xlane.xlu0 %932
    %v934 = vsel %vm930, %v800, -inf
    %935 = vmax.xlane.f32.xlu0 %v934
    %v936 = vpop.xlane.xlu0 %935
    %v937 = vsel %vm930, %v820, -inf
    %938 = vmax.xlane.f32.xlu0 %v937
    %v939 = vpop.xlane.xlu0 %938
    %v940 = vsel %vm930, %v840, -inf
    %941 = vmax.xlane.f32.xlu0 %v940
    %v942 = vpop.xlane.xlu0 %941
    %v943 = vsel %vm930, %v860, -inf
    %944 = vmax.xlane.f32.xlu0 %v943
    %v945 = vpop.xlane.xlu0 %944
    %v946 = vsel %vm930, %v880, -inf
    %947 = vmax.xlane.f32.xlu0 %v946
    %v948 = vpop.xlane.xlu0 %947
    %v949 = vsel %vm930, %v900, -inf
    %950 = vmax.xlane.f32.xlu0 %v949
    %v951 = vpop.xlane.xlu0 %950
    %v952 = vsel %vm930, %v920, -inf
    %953 = vmax.xlane.f32.xlu0 %v952
    %v954 = vpop.xlane.xlu0 %953
    %v955 = vmax.f32 %v922, %v933
    %v956 = vmax.f32 %v923, %v936
    %v957 = vmax.f32 %v924, %v939
    %v958 = vmax.f32 %v925, %v942
    %v959 = vmax.f32 %v926, %v945
    %v960 = vmax.f32 %v927, %v948
    %v961 = vmax.f32 %v928, %v951
    %v962 = vmax.f32 %v929, %v954
    %v963 = vsub.f32 %v922, %v955
    %v964 = vsub.f32 %v923, %v956
    %v965 = vsub.f32 %v924, %v957
    %v966 = vsub.f32 %v925, %v958
    %v967 = vsub.f32 %v926, %v959
    %v968 = vsub.f32 %v927, %v960
    %v969 = vsub.f32 %v928, %v961
    %v970 = vsub.f32 %v929, %v962
    %v971 = vmul.f32 %v963, 1.442695
    %v972 = vpow.pop %v971
    %v973 = vmul.f32 %v964, 1.442695
    %v974 = vpow.pop %v973
    %v975 = vmul.f32 %v965, 1.442695
    %v976 = vpow.pop %v975
    %v977 = vmul.f32 %v966, 1.442695
    %v978 = vpow.pop %v977
    %v979 = vmul.f32 %v967, 1.442695
    %v980 = vpow.pop %v979
    %v981 = vmul.f32 %v968, 1.442695
    %v982 = vpow.pop %v981
    %v983 = vmul.f32 %v969, 1.442695
    %v984 = vpow.pop %v983
    %v985 = vmul.f32 %v970, 1.442695
    %v986 = vpow.pop %v985
    %988 = vset.pattern.permute.xlu0 0
    %989 = vperm.xlu0 %988, %v955
    %v990 = vpop.permute.xlu0 %989
    %v992 = vperm.slane %v990, 0
    %994 = vset.pattern.permute.xlu0 0
    %995 = vperm.xlu0 %994, %v956
    %v996 = vpop.permute.xlu0 %995
    %v998 = vperm.slane %v996, 0
    %1000 = vset.pattern.permute.xlu0 0
    %1001 = vperm.xlu0 %1000, %v957
    %v1002 = vpop.permute.xlu0 %1001
    %v1004 = vperm.slane %v1002, 0
    %1006 = vset.pattern.permute.xlu0 0
    %1007 = vperm.xlu0 %1006, %v958
    %v1008 = vpop.permute.xlu0 %1007
    %v1010 = vperm.slane %v1008, 0
    %1012 = vset.pattern.permute.xlu0 0
    %1013 = vperm.xlu0 %1012, %v959
    %v1014 = vpop.permute.xlu0 %1013
    %v1016 = vperm.slane %v1014, 0
    %1018 = vset.pattern.permute.xlu0 0
    %1019 = vperm.xlu0 %1018, %v960
    %v1020 = vpop.permute.xlu0 %1019
    %v1022 = vperm.slane %v1020, 0
    %1024 = vset.pattern.permute.xlu0 0
    %1025 = vperm.xlu0 %1024, %v961
    %v1026 = vpop.permute.xlu0 %1025
    %v1028 = vperm.slane %v1026, 0
    %1030 = vset.pattern.permute.xlu0 0
    %1031 = vperm.xlu0 %1030, %v962
    %v1032 = vpop.permute.xlu0 %1031
    %v1034 = vperm.slane %v1032, 0
    %v1035 = vsub.f32 %v780, %v992
    %v1036 = vsub.f32 %v800, %v998
    %v1037 = vsub.f32 %v820, %v1004
    %v1038 = vsub.f32 %v840, %v1010
    %v1039 = vsub.f32 %v860, %v1016
    %v1040 = vsub.f32 %v880, %v1022
    %v1041 = vsub.f32 %v900, %v1028
    %v1042 = vsub.f32 %v920, %v1034
    %v1043 = vmul.f32 %v1035, 1.442695
    %v1044 = vpow.pop %v1043
    %v1045 = vmul.f32 %v1036, 1.442695
    %v1046 = vpow.pop %v1045
    %v1047 = vmul.f32 %v1037, 1.442695
    %v1048 = vpow.pop %v1047
    %v1049 = vmul.f32 %v1038, 1.442695
    %v1050 = vpow.pop %v1049
    %v1051 = vmul.f32 %v1039, 1.442695
    %v1052 = vpow.pop %v1051
    %v1053 = vmul.f32 %v1040, 1.442695
    %v1054 = vpow.pop %v1053
    %v1055 = vmul.f32 %v1041, 1.442695
    %v1056 = vpow.pop %v1055
    %v1057 = vmul.f32 %v1042, 1.442695
    %v1058 = vpow.pop %v1057
    %v1059 = vld [vmem:[#allocation4] sm:$0x1]
    %v1060 = vld [vmem:[#allocation4 + $0x1] sm:$0x1]
    %v1061 = vld [vmem:[#allocation4 + $0x2] sm:$0x1]
    %v1062 = vld [vmem:[#allocation4 + $0x3] sm:$0x1]
    %v1063 = vld [vmem:[#allocation4 + $0x4] sm:$0x1]
    %v1064 = vld [vmem:[#allocation4 + $0x5] sm:$0x1]
    %v1065 = vld [vmem:[#allocation4 + $0x6] sm:$0x1]
    %v1066 = vld [vmem:[#allocation4 + $0x7] sm:$0x1]
    %v1067 = vmul.f32 %v972, %v1059
    %v1068 = vmul.f32 %v974, %v1060
    %v1069 = vmul.f32 %v976, %v1061
    %v1070 = vmul.f32 %v978, %v1062
    %v1071 = vmul.f32 %v980, %v1063
    %v1072 = vmul.f32 %v982, %v1064
    %v1073 = vmul.f32 %v984, %v1065
    %v1074 = vmul.f32 %v986, %v1066
    %v1075 = vsel %vm930, %v1044, 0.0
    %1076 = vadd.xlane.f32.xlu0 %v1075
    %v1077 = vpop.xlane.xlu0 %1076
    %v1078 = vsel %vm930, %v1046, 0.0
    %1079 = vadd.xlane.f32.xlu0 %v1078
    %v1080 = vpop.xlane.xlu0 %1079
    %v1081 = vsel %vm930, %v1048, 0.0
    %1082 = vadd.xlane.f32.xlu0 %v1081
    %v1083 = vpop.xlane.xlu0 %1082
    %v1084 = vsel %vm930, %v1050, 0.0
    %1085 = vadd.xlane.f32.xlu0 %v1084
    %v1086 = vpop.xlane.xlu0 %1085
    %v1087 = vsel %vm930, %v1052, 0.0
    %1088 = vadd.xlane.f32.xlu0 %v1087
    %v1089 = vpop.xlane.xlu0 %1088
    %v1090 = vsel %vm930, %v1054, 0.0
    %1091 = vadd.xlane.f32.xlu0 %v1090
    %v1092 = vpop.xlane.xlu0 %1091
    %v1093 = vsel %vm930, %v1056, 0.0
    %1094 = vadd.xlane.f32.xlu0 %v1093
    %v1095 = vpop.xlane.xlu0 %1094
    %v1096 = vsel %vm930, %v1058, 0.0
    %1097 = vadd.xlane.f32.xlu0 %v1096
    %v1098 = vpop.xlane.xlu0 %1097
    %v1099 = vadd.f32 %v1067, %v1077
    %v1100 = vadd.f32 %v1068, %v1080
    %v1101 = vadd.f32 %v1069, %v1083
    %v1102 = vadd.f32 %v1070, %v1086
    %v1103 = vadd.f32 %v1071, %v1089
    %v1104 = vadd.f32 %v1072, %v1092
    %v1105 = vadd.f32 %v1073, %v1095
    %v1106 = vadd.f32 %v1074, %v1098
    %vm1107 = vcmask 0
    %1108 = vst.msk [vmem:[#allocation4] sm:$0x1] %vm1107, %v1099
    %1109 = vst.msk [vmem:[#allocation4 + $0x1] sm:$0x1] %vm1107, %v1100
    %1110 = vst.msk [vmem:[#allocation4 + $0x2] sm:$0x1] %vm1107, %v1101
    %1111 = vst.msk [vmem:[#allocation4 + $0x3] sm:$0x1] %vm1107, %v1102
    %1112 = vst.msk [vmem:[#allocation4 + $0x4] sm:$0x1] %vm1107, %v1103
    %1113 = vst.msk [vmem:[#allocation4 + $0x5] sm:$0x1] %vm1107, %v1104
    %1114 = vst.msk [vmem:[#allocation4 + $0x6] sm:$0x1] %vm1107, %v1105
    %1115 = vst.msk [vmem:[#allocation4 + $0x7] sm:$0x1] %vm1107, %v1106
    %v1116 = vld [vmem:[#allocation5] sm:$0x1]
    %v1117 = vld [vmem:[#allocation5 + $0x1] sm:$0x1]
    %v1118 = vld [vmem:[#allocation5 + $0x2] sm:$0x1]
    %v1119 = vld [vmem:[#allocation5 + $0x3] sm:$0x1]
    %v1120 = vld [vmem:[#allocation5 + $0x4] sm:$0x1]
    %v1121 = vld [vmem:[#allocation5 + $0x5] sm:$0x1]
    %v1122 = vld [vmem:[#allocation5 + $0x6] sm:$0x1]
    %v1123 = vld [vmem:[#allocation5 + $0x7] sm:$0x1]
    %1125 = vset.pattern.permute.xlu0 0
    %1126 = vperm.xlu0 %1125, %v972
    %v1127 = vpop.permute.xlu0 %1126
    %v1129 = vperm.slane %v1127, 0
    %1131 = vset.pattern.permute.xlu0 0
    %1132 = vperm.xlu0 %1131, %v974
    %v1133 = vpop.permute.xlu0 %1132
    %v1135 = vperm.slane %v1133, 0
    %1137 = vset.pattern.permute.xlu0 0
    %1138 = vperm.xlu0 %1137, %v976
    %v1139 = vpop.permute.xlu0 %1138
    %v1141 = vperm.slane %v1139, 0
    %1143 = vset.pattern.permute.xlu0 0
    %1144 = vperm.xlu0 %1143, %v978
    %v1145 = vpop.permute.xlu0 %1144
    %v1147 = vperm.slane %v1145, 0
    %1149 = vset.pattern.permute.xlu0 0
    %1150 = vperm.xlu0 %1149, %v980
    %v1151 = vpop.permute.xlu0 %1150
    %v1153 = vperm.slane %v1151, 0
    %1155 = vset.pattern.permute.xlu0 0
    %1156 = vperm.xlu0 %1155, %v982
    %v1157 = vpop.permute.xlu0 %1156
    %v1159 = vperm.slane %v1157, 0
    %1161 = vset.pattern.permute.xlu0 0
    %1162 = vperm.xlu0 %1161, %v984
    %v1163 = vpop.permute.xlu0 %1162
    %v1165 = vperm.slane %v1163, 0
    %1167 = vset.pattern.permute.xlu0 0
    %1168 = vperm.xlu0 %1167, %v986
    %v1169 = vpop.permute.xlu0 %1168
    %v1171 = vperm.slane %v1169, 0
    %v1172 = vmul.f32 %v1129, %v1116
    %v1173 = vmul.f32 %v1135, %v1117
    %v1174 = vmul.f32 %v1141, %v1118
    %v1175 = vmul.f32 %v1147, %v1119
    %v1176 = vmul.f32 %v1153, %v1120
    %v1177 = vmul.f32 %v1159, %v1121
    %v1178 = vmul.f32 %v1165, %v1122
    %v1179 = vmul.f32 %v1171, %v1123
    %1180 = vmatpush.msra.mxu0 %v212
    %1181 = vmatpush.msra.mxu0 %v211
    %1182 = vmatpush.msra.mxu0 %v210
    %1183 = vmatpush.msra.mxu0 %v209
    %1184 = vmatpush.msra.mxu0 %v208
    %1185 = vmatpush.msra.mxu0 %v207
    %1186 = vmatpush.msra.mxu0 %v206
    %1187 = vmatpush.msra.mxu0 %v205
    %1188 = vmatpush.msra.mxu0 %v204
    %1189 = vmatpush.msra.mxu0 %v203
    %1190 = vmatpush.msra.mxu0 %v202
    %1191 = vmatpush.msra.mxu0 %v201
    %1192 = vmatpush.msra.mxu0 %v200
    %1193 = vmatpush.msra.mxu0 %v199
    %1194 = vmatpush.msra.mxu0 %v198
    %1195 = vmatpush.msra.mxu0 %v197
    %1196 = vmatmul.f32.gmra.mxu0 %v1044
    %v1197 = vpop.f32.mrf.mxu0
    %v1198 = vadd.f32 0.0, %v1197
    %1199 = vdwg.mxu0
    %1200 = vmatpush.msra.mxu0 %v228
    %1201 = vmatpush.msra.mxu0 %v227
    %1202 = vmatpush.msra.mxu0 %v226
    %1203 = vmatpush.msra.mxu0 %v225
    %1204 = vmatpush.msra.mxu0 %v224
    %1205 = vmatpush.msra.mxu0 %v223
    %1206 = vmatpush.msra.mxu0 %v222
    %1207 = vmatpush.msra.mxu0 %v221
    %1208 = vmatpush.msra.mxu0 %v220
    %1209 = vmatpush.msra.mxu0 %v219
    %1210 = vmatpush.msra.mxu0 %v218
    %1211 = vmatpush.msra.mxu0 %v217
    %1212 = vmatpush.msra.mxu0 %v216
    %1213 = vmatpush.msra.mxu0 %v215
    %1214 = vmatpush.msra.mxu0 %v214
    %1215 = vmatpush.msra.mxu0 %v213
    %1216 = vmatmul.f32.gmra.mxu0 %v1046
    %v1217 = vpop.f32.mrf.mxu0
    %v1218 = vadd.f32 0.0, %v1217
    %1219 = vdwg.mxu0
    %1220 = vmatpush.msra.mxu0 %v244
    %1221 = vmatpush.msra.mxu0 %v243
    %1222 = vmatpush.msra.mxu0 %v242
    %1223 = vmatpush.msra.mxu0 %v241
    %1224 = vmatpush.msra.mxu0 %v240
    %1225 = vmatpush.msra.mxu0 %v239
    %1226 = vmatpush.msra.mxu0 %v238
    %1227 = vmatpush.msra.mxu0 %v237
    %1228 = vmatpush.msra.mxu0 %v236
    %1229 = vmatpush.msra.mxu0 %v235
    %1230 = vmatpush.msra.mxu0 %v234
    %1231 = vmatpush.msra.mxu0 %v233
    %1232 = vmatpush.msra.mxu0 %v232
    %1233 = vmatpush.msra.mxu0 %v231
    %1234 = vmatpush.msra.mxu0 %v230
    %1235 = vmatpush.msra.mxu0 %v229
    %1236 = vmatmul.f32.gmra.mxu0 %v1048
    %v1237 = vpop.f32.mrf.mxu0
    %v1238 = vadd.f32 0.0, %v1237
    %1239 = vdwg.mxu0
    %1240 = vmatpush.msra.mxu0 %v260
    %1241 = vmatpush.msra.mxu0 %v259
    %1242 = vmatpush.msra.mxu0 %v258
    %1243 = vmatpush.msra.mxu0 %v257
    %1244 = vmatpush.msra.mxu0 %v256
    %1245 = vmatpush.msra.mxu0 %v255
    %1246 = vmatpush.msra.mxu0 %v254
    %1247 = vmatpush.msra.mxu0 %v253
    %1248 = vmatpush.msra.mxu0 %v252
    %1249 = vmatpush.msra.mxu0 %v251
    %1250 = vmatpush.msra.mxu0 %v250
    %1251 = vmatpush.msra.mxu0 %v249
    %1252 = vmatpush.msra.mxu0 %v248
    %1253 = vmatpush.msra.mxu0 %v247
    %1254 = vmatpush.msra.mxu0 %v246
    %1255 = vmatpush.msra.mxu0 %v245
    %1256 = vmatmul.f32.gmra.mxu0 %v1050
    %v1257 = vpop.f32.mrf.mxu0
    %v1258 = vadd.f32 0.0, %v1257
    %1259 = vdwg.mxu0
    %1260 = vmatpush.msra.mxu0 %v276
    %1261 = vmatpush.msra.mxu0 %v275
    %1262 = vmatpush.msra.mxu0 %v274
    %1263 = vmatpush.msra.mxu0 %v273
    %1264 = vmatpush.msra.mxu0 %v272
    %1265 = vmatpush.msra.mxu0 %v271
    %1266 = vmatpush.msra.mxu0 %v270
    %1267 = vmatpush.msra.mxu0 %v269
    %1268 = vmatpush.msra.mxu0 %v268
    %1269 = vmatpush.msra.mxu0 %v267
    %1270 = vmatpush.msra.mxu0 %v266
    %1271 = vmatpush.msra.mxu0 %v265
    %1272 = vmatpush.msra.mxu0 %v264
    %1273 = vmatpush.msra.mxu0 %v263
    %1274 = vmatpush.msra.mxu0 %v262
    %1275 = vmatpush.msra.mxu0 %v261
    %1276 = vmatmul.f32.gmra.mxu0 %v1052
    %v1277 = vpop.f32.mrf.mxu0
    %v1278 = vadd.f32 0.0, %v1277
    %1279 = vdwg.mxu0
    %1280 = vmatpush.msra.mxu0 %v292
    %1281 = vmatpush.msra.mxu0 %v291
    %1282 = vmatpush.msra.mxu0 %v290
    %1283 = vmatpush.msra.mxu0 %v289
    %1284 = vmatpush.msra.mxu0 %v288
    %1285 = vmatpush.msra.mxu0 %v287
    %1286 = vmatpush.msra.mxu0 %v286
    %1287 = vmatpush.msra.mxu0 %v285
    %1288 = vmatpush.msra.mxu0 %v284
    %1289 = vmatpush.msra.mxu0 %v283
    %1290 = vmatpush.msra.mxu0 %v282
    %1291 = vmatpush.msra.mxu0 %v281
    %1292 = vmatpush.msra.mxu0 %v280
    %1293 = vmatpush.msra.mxu0 %v279
    %1294 = vmatpush.msra.mxu0 %v278
    %1295 = vmatpush.msra.mxu0 %v277
    %1296 = vmatmul.f32.gmra.mxu0 %v1054
    %v1297 = vpop.f32.mrf.mxu0
    %v1298 = vadd.f32 0.0, %v1297
    %1299 = vdwg.mxu0
    %1300 = vmatpush.msra.mxu0 %v308
    %1301 = vmatpush.msra.mxu0 %v307
    %1302 = vmatpush.msra.mxu0 %v306
    %1303 = vmatpush.msra.mxu0 %v305
    %1304 = vmatpush.msra.mxu0 %v304
    %1305 = vmatpush.msra.mxu0 %v303
    %1306 = vmatpush.msra.mxu0 %v302
    %1307 = vmatpush.msra.mxu0 %v301
    %1308 = vmatpush.msra.mxu0 %v300
    %1309 = vmatpush.msra.mxu0 %v299
    %1310 = vmatpush.msra.mxu0 %v298
    %1311 = vmatpush.msra.mxu0 %v297
    %1312 = vmatpush.msra.mxu0 %v296
    %1313 = vmatpush.msra.mxu0 %v295
    %1314 = vmatpush.msra.mxu0 %v294
    %1315 = vmatpush.msra.mxu0 %v293
    %1316 = vmatmul.f32.gmra.mxu0 %v1056
    %v1317 = vpop.f32.mrf.mxu0
    %v1318 = vadd.f32 0.0, %v1317
    %1319 = vdwg.mxu0
    %1320 = vmatpush.msra.mxu0 %v324
    %1321 = vmatpush.msra.mxu0 %v323
    %1322 = vmatpush.msra.mxu0 %v322
    %1323 = vmatpush.msra.mxu0 %v321
    %1324 = vmatpush.msra.mxu0 %v320
    %1325 = vmatpush.msra.mxu0 %v319
    %1326 = vmatpush.msra.mxu0 %v318
    %1327 = vmatpush.msra.mxu0 %v317
    %1328 = vmatpush.msra.mxu0 %v316
    %1329 = vmatpush.msra.mxu0 %v315
    %1330 = vmatpush.msra.mxu0 %v314
    %1331 = vmatpush.msra.mxu0 %v313
    %1332 = vmatpush.msra.mxu0 %v312
    %1333 = vmatpush.msra.mxu0 %v311
    %1334 = vmatpush.msra.mxu0 %v310
    %1335 = vmatpush.msra.mxu0 %v309
    %1336 = vmatmul.f32.gmra.mxu0 %v1058
    %v1337 = vpop.f32.mrf.mxu0
    %v1338 = vadd.f32 0.0, %v1337
    %1339 = vdwg.mxu0
    %v1340 = vadd.f32 %v1172, %v1198
    %v1341 = vadd.f32 %v1173, %v1218
    %v1342 = vadd.f32 %v1174, %v1238
    %v1343 = vadd.f32 %v1175, %v1258
    %v1344 = vadd.f32 %v1176, %v1278
    %v1345 = vadd.f32 %v1177, %v1298
    %v1346 = vadd.f32 %v1178, %v1318
    %v1347 = vadd.f32 %v1179, %v1338
    %1348 = vst [vmem:[#allocation5] sm:$0x1] %v1340
    %1349 = vst [vmem:[#allocation5 + $0x1] sm:$0x1] %v1341
    %1350 = vst [vmem:[#allocation5 + $0x2] sm:$0x1] %v1342
    %1351 = vst [vmem:[#allocation5 + $0x3] sm:$0x1] %v1343
    %1352 = vst [vmem:[#allocation5 + $0x4] sm:$0x1] %v1344
    %1353 = vst [vmem:[#allocation5 + $0x5] sm:$0x1] %v1345
    %1354 = vst [vmem:[#allocation5 + $0x6] sm:$0x1] %v1346
    %1355 = vst [vmem:[#allocation5 + $0x7] sm:$0x1] %v1347
    %1356 = vst.msk [vmem:[#allocation3] sm:$0x1] %vm1107, %v955
    %1357 = vst.msk [vmem:[#allocation3 + $0x1] sm:$0x1] %vm1107, %v956
    %1358 = vst.msk [vmem:[#allocation3 + $0x2] sm:$0x1] %vm1107, %v957
    %1359 = vst.msk [vmem:[#allocation3 + $0x3] sm:$0x1] %vm1107, %v958
    %1360 = vst.msk [vmem:[#allocation3 + $0x4] sm:$0x1] %vm1107, %v959
    %1361 = vst.msk [vmem:[#allocation3 + $0x5] sm:$0x1] %vm1107, %v960
    %1362 = vst.msk [vmem:[#allocation3 + $0x6] sm:$0x1] %vm1107, %v961
    %1363 = vst.msk [vmem:[#allocation3 + $0x7] sm:$0x1] %vm1107, %v962
    // Predicated region
    $region54: #{tpu_custom_call.1} parent=1 // pred_check
      %p1364 = pneg %p103
    $region55: #{tpu_custom_call.1} parent=1 // pred_check_branch
      %1366 = sbr.rel (%p1364) target = $region57
    $region56: #{tpu_custom_call.1} parent=1 // pred_region
      %v1367 = vld [vmem:[#allocation4] sm:$0x1]
      %v1368 = vld [vmem:[#allocation4 + $0x1] sm:$0x1]
      %v1369 = vld [vmem:[#allocation4 + $0x2] sm:$0x1]
      %v1370 = vld [vmem:[#allocation4 + $0x3] sm:$0x1]
      %v1371 = vld [vmem:[#allocation4 + $0x4] sm:$0x1]
      %v1372 = vld [vmem:[#allocation4 + $0x5] sm:$0x1]
      %v1373 = vld [vmem:[#allocation4 + $0x6] sm:$0x1]
      %v1374 = vld [vmem:[#allocation4 + $0x7] sm:$0x1]
      %v1375 = vrcp.pop %v1367
      %v1376 = vrcp.pop %v1368
      %v1377 = vrcp.pop %v1369
      %v1378 = vrcp.pop %v1370
      %v1379 = vrcp.pop %v1371
      %v1380 = vrcp.pop %v1372
      %v1381 = vrcp.pop %v1373
      %v1382 = vrcp.pop %v1374
      %v1383 = vld [vmem:[#allocation5] sm:$0x1]
      %v1384 = vld [vmem:[#allocation5 + $0x1] sm:$0x1]
      %v1385 = vld [vmem:[#allocation5 + $0x2] sm:$0x1]
      %v1386 = vld [vmem:[#allocation5 + $0x3] sm:$0x1]
      %v1387 = vld [vmem:[#allocation5 + $0x4] sm:$0x1]
      %v1388 = vld [vmem:[#allocation5 + $0x5] sm:$0x1]
      %v1389 = vld [vmem:[#allocation5 + $0x6] sm:$0x1]
      %v1390 = vld [vmem:[#allocation5 + $0x7] sm:$0x1]
      %1392 = vset.pattern.permute.xlu0 0
      %1393 = vperm.xlu0 %1392, %v1375
      %v1394 = vpop.permute.xlu0 %1393
      %v1396 = vperm.slane %v1394, 0
      %1398 = vset.pattern.permute.xlu0 0
      %1399 = vperm.xlu0 %1398, %v1376
      %v1400 = vpop.permute.xlu0 %1399
      %v1402 = vperm.slane %v1400, 0
      %1404 = vset.pattern.permute.xlu0 0
      %1405 = vperm.xlu0 %1404, %v1377
      %v1406 = vpop.permute.xlu0 %1405
      %v1408 = vperm.slane %v1406, 0
      %1410 = vset.pattern.permute.xlu0 0
      %1411 = vperm.xlu0 %1410, %v1378
      %v1412 = vpop.permute.xlu0 %1411
      %v1414 = vperm.slane %v1412, 0
      %1416 = vset.pattern.permute.xlu0 0
      %1417 = vperm.xlu0 %1416, %v1379
      %v1418 = vpop.permute.xlu0 %1417
      %v1420 = vperm.slane %v1418, 0
      %1422 = vset.pattern.permute.xlu0 0
      %1423 = vperm.xlu0 %1422, %v1380
      %v1424 = vpop.permute.xlu0 %1423
      %v1426 = vperm.slane %v1424, 0
      %1428 = vset.pattern.permute.xlu0 0
      %1429 = vperm.xlu0 %1428, %v1381
      %v1430 = vpop.permute.xlu0 %1429
      %v1432 = vperm.slane %v1430, 0
      %1434 = vset.pattern.permute.xlu0 0
      %1435 = vperm.xlu0 %1434, %v1382
      %v1436 = vpop.permute.xlu0 %1435
      %v1438 = vperm.slane %v1436, 0
      %v1439 = vmul.f32 %v1383, %v1396
      %v1440 = vmul.f32 %v1384, %v1402
      %v1441 = vmul.f32 %v1385, %v1408
      %v1442 = vmul.f32 %v1386, %v1414
      %v1443 = vmul.f32 %v1387, %v1420
      %v1444 = vmul.f32 %v1388, %v1426
      %v1445 = vmul.f32 %v1389, %v1432
      %v1446 = vmul.f32 %v1390, %v1438
      %1447 = vst [vmem:[#allocation15] sm:$0x1] %v1439
      %1448 = vst [vmem:[#allocation15 + $0x1] sm:$0x1] %v1440
      %1449 = vst [vmem:[#allocation15 + $0x2] sm:$0x1] %v1441
      %1450 = vst [vmem:[#allocation15 + $0x3] sm:$0x1] %v1442
      %1451 = vst [vmem:[#allocation15 + $0x4] sm:$0x1] %v1443
      %1452 = vst [vmem:[#allocation15 + $0x5] sm:$0x1] %v1444
      %1453 = vst [vmem:[#allocation15 + $0x6] sm:$0x1] %v1445
      %1454 = vst [vmem:[#allocation15 + $0x7] sm:$0x1] %v1446
    $region57: #{tpu_custom_call.1} parent=1 // pred_fallthru
      _
    // Predicated region
    $region58: #{tpu_custom_call.1} parent=1 // pred_check
      _
    $region59: #{tpu_custom_call.1} parent=1 // pred_check_branch
      %1456 = sbr.rel (0) target = $region61
    $region60: #{tpu_custom_call.1} parent=1 // pred_region
      %1458 = vsyncadd [#allocation8], 0
      %s1459 = sshll.u32 [#allocation15], 4
      %s1460 = int_to_ptr.vmem [resolvable:$true] %s1459
      %s1461 = sshll.u32 %s7, 4
      %s1462 = int_to_ptr.hbm [resolvable:$true] %s1461
      %1467 = dma.vmem_to_hbm [thread:$0]  %s1460, 128, %s1462, [#allocation8], 16, 16, 1
    $region61: #{tpu_custom_call.1} parent=1 // pred_fallthru
      _
    // Predicated region
    $region62: #{tpu_custom_call.1} parent=1 // pred_check
      _
    $region63: #{tpu_custom_call.1} parent=1 // pred_check_branch
      %1469 = sbr.rel (0) target = $region65
    $region64: #{tpu_custom_call.1} parent=1 // pred_region
      %1471 = dma.done [#allocation8], 128
    $region65: #{tpu_custom_call.1} parent=1 // pred_fallthru
      _
    %1472 = vsyncpa [#allocation7], 1
    %1473 = vsyncpa [#allocation10], 1
    %1474 = vsyncpa [#allocation13], 1
    %1475 = vsyncpa [#allocation8], 1

</llo_original>
